<compile_context>
chip_gen: v6e
topology: v6e:2x2x1
jax: 0.10.0
libtpu: 0.0.40
codegen_flags: <defaults>
</compile_context>

<pallas_src>
import numpy as np
import jax
import jax.numpy as jnp
from jax.experimental import pallas as pl
from jax.experimental.pallas import tpu as pltpu

# ----------------------------- small config --------------------------------
B = 2                      # batch size
RAND_FEATURES = 32         # rand_features
OUT_DIM = 3                # out_dimensions
OUT_SAMPLES = 8            # out_samples
CHANNEL_COEFF = 1          # channel_coefficient
FIRST_KERNEL = (1, 4)      # first_layer_kernel_size
KERNEL = (1, 3)            # kernel_size
STRIDE = (1, 2)            # stride (conv2 / conv3)
EPS = 1e-5                 # BatchNorm eps
# fix_r=None, clip_output=False, r_options=[]  -> those forward branches are no-ops.

OUT_FEATURES = int(OUT_SAMPLES * OUT_DIM / 2)       # 12
W0 = OUT_FEATURES // OUT_DIM                        # 4  (initial feature-map width)

C1, C2, C3 = 32 * CHANNEL_COEFF, 16 * CHANNEL_COEFF, 8 * CHANNEL_COEFF
KW1, KW = FIRST_KERNEL[1], KERNEL[1]
S1, S23 = 3, STRIDE[1]


def _convT_out_w(w_in, k, s):
    return (w_in - 1) * s + k


W1 = _convT_out_w(W0, KW1, S1)     # 13
W2 = _convT_out_w(W1, KW, S23)     # 27
W3 = _convT_out_w(W2, KW, S23)     # 55
W4 = _convT_out_w(W3, KW, 1)       # 57

R0, R1, R2, R3, R4 = W0 * B, W1 * B, W2 * B, W3 * B, W4 * B   # 8, 26, 54, 110, 114

# ----------------------- packed-constant slab layouts ------------------------
# f32 slab: lane-dense (128 wide), segments hand-placed at (row, lane) offsets.
CS_W = 128
CS_ROWS = 56
CS_SEGS = {  # name: (row_off, lane_off, n_rows, n_cols)
    "wcat2": (0, 0, C1, KW * C2),                  # (32, 48) fused conv2 taps
    "wl":    (0, 48, RAND_FEATURES, OUT_FEATURES), # (32, 12) linear weight (perm'd)
    "wcat3": (0, 64, C2, KW * C3),                 # (16, 24) fused conv3 taps
    "wcat4": (16, 64, C3, KW * OUT_DIM),           # (8, 9)   fused conv4 taps
    "mask1": (0, 88, R0, OUT_FEATURES),            # (8, 12)  unflatten width mask
    "wcat1": (32, 0, OUT_FEATURES, KW1 * C1),      # (12,128) fused conv1 taps (width-tiled)
    "bl":    (48, 0, 1, OUT_FEATURES),
    "b4":    (49, 0, 1, OUT_DIM),
    "g1":    (50, 0, 1, C1),
    "be1":   (51, 0, 1, C1),
    "g2":    (52, 0, 1, C2),
    "be2":   (53, 0, 1, C2),
    "g3":    (54, 0, 1, C3),
    "be3":   (55, 0, 1, C3),
}

# bf16 slab: stacked 0/1 row-scatter matrices (exact in bf16).
LS_W = KW * R2                                     # 162
LS_ROWS = 176
LS_SEGS = {  # name: (row_off, lane_off, n_rows, n_cols)
    "L3": (0, 0, R3, KW * R2),                     # (110, 162)
    "L2": (112, 0, R2, KW * R1),                   # (54, 78)
    "L1": (112, 80, R1, KW1 * R0),                 # (26, 32)
}


# ----------------------------- Pallas kernel --------------------------------
def generator_kernel(noise_ref, cs_ref, ls_ref, out_ref):
    f32 = jnp.float32

    def cs(name):
        r, c, nr, nc = CS_SEGS[name]
        return cs_ref[r:r + nr, c:c + nc]

    def lsm(name):
        r, c, nr, nc = LS_SEGS[name]
        return ls_ref[r:r + nr, c:c + nc].astype(f32)     # exact 0/1 cast

    def mm(a, b):
        return jnp.dot(a, b, preferred_element_type=f32)

    # Linear(rand_features -> out_features) + ReLU; output lanes pre-permuted
    # to width-major channel-minor order at parameter-build time.
    h = jnp.maximum(mm(noise_ref[...], cs("wl")) + cs("bl"), 0.0)          # (B, 12)

    # Unflatten to rows (w-major, b-minor): sublane-concat replication (VPU,
    # no matmul) + constant mask keeping each row's own width triple.
    x = jnp.concatenate([h] * W0, axis=0) * cs("mask1")                    # (R0, 12)

    def conv_strided(x_in, wname, lname, n_taps, c_out):
        # ConvTranspose2d = one fused channel-mix matmul (all taps in lanes)
        # followed by one stacked 0/1 row-scatter matmul.
        v = mm(x_in, cs(wname))                                            # (R_in, taps*c_out)
        vstack = jnp.concatenate(
            [v[:, k * c_out:(k + 1) * c_out] for k in range(n_taps)], axis=0)
        return mm(lsm(lname), vstack)                                      # (R_out, c_out)

    def bn_relu(y, gname, bname):
        # BatchNorm2d (training mode, biased stats) over all (b, w) rows.
        inv_n = 1.0 / y.shape[0]
        mean = jnp.sum(y, axis=0, keepdims=True) * inv_n
        yc = y - mean
        var = jnp.sum(yc * yc, axis=0, keepdims=True) * inv_n
        scale = cs(gname) * jax.lax.rsqrt(var + EPS)
        return jnp.maximum(yc * scale + cs(bname), 0.0)

    # Conv biases of layers 1-3 are omitted: training-mode BN is exactly
    # invariant to a per-channel constant added before it.
    a = bn_relu(conv_strided(x, "wcat1", "L1", KW1, C1), "g1", "be1")      # (R1, C1)
    a = bn_relu(conv_strided(a, "wcat2", "L2", KW, C2), "g2", "be2")       # (R2, C2)
    a = bn_relu(conv_strided(a, "wcat3", "L3", KW, C3), "g3", "be3")       # (R3, C3)

    # Final ConvTranspose2d (stride 1): fused channel-mix matmul + shifted adds
    # (no scatter matrix), then bias and Sigmoid.
    v4 = mm(a, cs("wcat4"))                                                # (R3, 9)
    t0 = v4[:, 0:OUT_DIM]
    t1 = v4[:, OUT_DIM:2 * OUT_DIM]
    t2 = v4[:, 2 * OUT_DIM:3 * OUT_DIM]
    z2 = jnp.zeros((B, OUT_DIM), f32)
    z4 = jnp.zeros((2 * B, OUT_DIM), f32)
    y = (jnp.concatenate([t0, z4], axis=0)
         + jnp.concatenate([z2, t1, z2], axis=0)
         + jnp.concatenate([z4, t2], axis=0)
         + cs("b4"))                                                       # (R4, 3)
    out_ref[...] = 1.0 / (1.0 + jnp.exp(-y))


@jax.jit
def _pallas_forward(noise, cs_slab, ls_slab):
    return pl.pallas_call(
        generator_kernel,
        out_shape=jax.ShapeDtypeStruct((R4, OUT_DIM), jnp.float32),
        in_specs=[pl.BlockSpec(memory_space=pltpu.MemorySpace.VMEM)] * 3,
        out_specs=pl.BlockSpec(memory_space=pltpu.MemorySpace.VMEM),
    )(noise, cs_slab, ls_slab)


# ----------------------- parameter init (PyTorch shapes) --------------------
def init_torch_style_params(key):
    ks = jax.random.split(key, 24)

    def u(k, shape, lo, hi):
        return jax.random.uniform(k, shape, jnp.float32, lo, hi)

    # nn.Linear: weight (out, in), bias (out,)
    w_lin = u(ks[0], (OUT_FEATURES, RAND_FEATURES), -0.3, 0.3)
    b_lin = u(ks[1], (OUT_FEATURES,), -0.15, 0.15)

    conv_cfg = [  # (Cin, Cout, KW, stride_w)
        (OUT_DIM, C1, KW1, S1),
        (C1, C2, KW, S23),
        (C2, C3, KW, S23),
        (C3, OUT_DIM, KW, 1),
    ]
    conv_w, conv_b = [], []
    ki = 2
    for (cin, cout, kw, _sw) in conv_cfg:
        conv_w.append(u(ks[ki], (cin, cout, 1, kw), -0.3, 0.3)); ki += 1   # ConvTranspose2d weight
        conv_b.append(u(ks[ki], (cout,), -0.15, 0.15)); ki += 1
    bn_g, bn_b = [], []
    for cout in (C1, C2, C3):
        bn_g.append(u(ks[ki], (cout,), -0.3, 0.3)); ki += 1
        bn_b.append(u(ks[ki], (cout,), -0.15, 0.15)); ki += 1
    return (w_lin, b_lin, conv_w, conv_b, bn_g, bn_b)


# ----------------------- kernel parameter building ---------------------------
def _build_L(win, wout, stride, k):
    """0/1 row-scatter: places input row (w, b) at output row (w*stride + k, b)."""
    L = np.zeros((wout * B, win * B), np.float32)
    for w in range(win):
        j = w * stride + k
        for b in range(B):
            L[j * B + b, w * B + b] = 1.0
    return L


def _pack(segs, rows, width, vals, dtype):
    slab = np.zeros((rows, width), np.float32)
    occ = np.zeros((rows, width), np.bool_)
    for name, (r, c, nr, nc) in segs.items():
        arr = np.asarray(vals[name], np.float32)
        assert arr.shape == (nr, nc), (name, arr.shape, (nr, nc))
        assert not occ[r:r + nr, c:c + nc].any(), f"slab overlap at {name}"
        occ[r:r + nr, c:c + nc] = True
        slab[r:r + nr, c:c + nc] = arr
    return jnp.asarray(slab).astype(dtype)


def build_kernel_params(torch_params):
    w_lin, b_lin, conv_w, conv_b, bn_g, bn_b = torch_params
    vals = {}

    # Linear weights/bias, output lanes permuted to w-major channel-minor.
    perm = np.array([c * W0 + w for w in range(W0) for c in range(OUT_DIM)], np.int64)
    vals["wl"] = np.asarray(w_lin, np.float32).T[:, perm]              # (32, 12)
    vals["bl"] = np.asarray(b_lin, np.float32)[perm].reshape(1, -1)

    # Mask selecting lane block [3w, 3w+3) for row (w, b).
    mask1 = np.zeros((R0, OUT_FEATURES), np.float32)
    for w in range(W0):
        mask1[w * B:(w + 1) * B, w * OUT_DIM:(w + 1) * OUT_DIM] = 1.0
    vals["mask1"] = mask1

    # Fused conv tap weights (all taps concatenated along lanes).  conv1 taps
    # are width-tiled to (12, C1) each so the masked (R0, 12) activation can be
    # used without any lane slicing; fused width is exactly 4*32 = 128 lanes.
    w1 = np.asarray(conv_w[0], np.float32)                              # (3, C1, 1, 4)
    vals["wcat1"] = np.concatenate(
        [np.tile(w1[:, :, 0, k], (W0, 1)) for k in range(KW1)], axis=1)
    for name, cw in (("wcat2", conv_w[1]), ("wcat3", conv_w[2]), ("wcat4", conv_w[3])):
        wnp = np.asarray(cw, np.float32)
        vals[name] = np.concatenate([wnp[:, :, 0, k] for k in range(KW)], axis=1)

    vals["b4"] = np.asarray(conv_b[3], np.float32).reshape(1, -1)
    for i, (g, bt) in enumerate(zip(bn_g, bn_b), start=1):
        vals[f"g{i}"] = np.asarray(g, np.float32).reshape(1, -1)
        vals[f"be{i}"] = np.asarray(bt, np.float32).reshape(1, -1)

    # Stacked 0/1 scatter matrices (taps hstacked), bf16-exact values.
    vals["L1"] = np.concatenate([_build_L(W0, W1, S1, k) for k in range(KW1)], axis=1)
    vals["L2"] = np.concatenate([_build_L(W1, W2, S23, k) for k in range(KW)], axis=1)
    vals["L3"] = np.concatenate([_build_L(W2, W3, S23, k) for k in range(KW)], axis=1)

    cs_slab = _pack(CS_SEGS, CS_ROWS, CS_W, vals, jnp.float32)          # (56, 128)  f32
    ls_slab = _pack(LS_SEGS, LS_ROWS, LS_W, vals, jnp.bfloat16)         # (176, 162) bf16
    return (cs_slab, ls_slab)


# ------------------------------ wrapper -------------------------------------
def generator_apply(x, kernel_params, noise_key):
    """Mirror of Generator.forward: x only supplies the batch size."""
    batch = x.shape[0]
    assert batch == B
    # generate_noise(): torch.rand -> uniform [0, 1)
    noise = jax.random.uniform(noise_key, (batch, RAND_FEATURES), jnp.float32)
    yk = _pallas_forward(noise, *kernel_params)              # (W4*B, OUT_DIM), rows (w, b)
    fm = yk.reshape(W4, batch, OUT_DIM).transpose(1, 2, 0)   # (B, C, W4)  == NCHW (H squeezed)
    flat = fm.reshape(batch, -1)                             # nn.Flatten(1, -1)
    pts = flat.reshape(batch, -1, OUT_DIM)                   # Unflatten(1, (-1, out_dim))
    out = pts[:, :OUT_SAMPLES, :]                            # out[:, :out_samples, :]
    # fix_r is None and clip_output is False for this config -> no-ops.
    return out, noise


# ------------------------- pure-numpy NCHW reference -------------------------
def _convT_1d_ref(x, w, b, sw):
    Bn, cin, _h, win = x.shape
    _ci, cout, _kh, kw = w.shape
    wout = (win - 1) * sw + kw
    out = np.zeros((Bn, cout, 1, wout), dtype=np.float64)
    contrib = np.einsum('biw,iok->bowk',
                        np.asarray(x[:, :, 0, :], dtype=np.float64),
                        np.asarray(w[:, :, 0, :], dtype=np.float64))
    for iw in range(win):
        out[:, :, 0, iw * sw: iw * sw + kw] += contrib[:, :, iw, :]
    out += np.asarray(b, dtype=np.float64).reshape(1, -1, 1, 1)
    return out


def _bn_relu_ref(x, g, bta):
    mean = x.mean(axis=(0, 2, 3), keepdims=True)
    var = x.var(axis=(0, 2, 3), keepdims=True)        # biased, training-mode BN
    y = (x - mean) / np.sqrt(var + EPS)
    y = y * np.asarray(g, dtype=np.float64).reshape(1, -1, 1, 1) \
        + np.asarray(bta, dtype=np.float64).reshape(1, -1, 1, 1)
    return np.maximum(y, 0.0)


def reference_forward(noise, torch_params):
    w_lin, b_lin, conv_w, conv_b, bn_g, bn_b = torch_params
    h = np.asarray(noise, np.float64) @ np.asarray(w_lin, np.float64).T \
        + np.asarray(b_lin, np.float64)
    h = np.maximum(h, 0.0)
    fm = h.reshape(B, OUT_DIM, 1, W0)
    fm = _bn_relu_ref(_convT_1d_ref(fm, np.asarray(conv_w[0]), conv_b[0], S1), bn_g[0], bn_b[0])
    fm = _bn_relu_ref(_convT_1d_ref(fm, np.asarray(conv_w[1]), conv_b[1], S23), bn_g[1], bn_b[1])
    fm = _bn_relu_ref(_convT_1d_ref(fm, np.asarray(conv_w[2]), conv_b[2], S23), bn_g[2], bn_b[2])
    fm = _convT_1d_ref(fm, np.asarray(conv_w[3]), conv_b[3], 1)
    flat = fm.reshape(B, -1)                                   # nn.Flatten(1, -1) on NCHW
    pts = 1.0 / (1.0 + np.exp(-flat.reshape(B, -1, OUT_DIM)))  # Unflatten + Sigmoid
    return pts[:, :OUT_SAMPLES, :]


# --------------------------------- main --------------------------------------
if __name__ == "__main__":
    root = jax.random.PRNGKey(0)
    k_x, k_noise, k_params = jax.random.split(root, 3)

    # forward(x) only reads x.size(0); give it a small deterministic input.
    x = jax.random.normal(k_x, (B, RAND_FEATURES), jnp.float32)

    torch_params = init_torch_style_params(k_params)
    kernel_params = build_kernel_params(torch_params)

    out, noise = generator_apply(x, kernel_params, k_noise)
    out = jax.block_until_ready(out)

    assert out.shape == (B, OUT_SAMPLES, OUT_DIM)
    ref = reference_forward(np.asarray(noise), torch_params)
    np.testing.assert_allclose(np.asarray(out), ref, rtol=2e-3, atol=2e-3)

    print("KERNEL_OK")
</pallas_src>

<mosaic_0001>
module attributes {stable_mosaic.version = 11 : i64} {
  func.func @generator_kernel(%arg0: memref<2x32xf32, #tpu.memory_space<vmem>>, %arg1: memref<56x128xf32, #tpu.memory_space<vmem>>, %arg2: memref<176x162xbf16, #tpu.memory_space<vmem>>, %arg3: memref<114x3xf32, #tpu.memory_space<vmem>>) attributes {dimension_semantics = [], scalar_prefetch = 0 : i64, scratch_operands = 0 : i64, tpu.core_type = #tpu.core_type<tc>} {
    %c0 = arith.constant 0 : index
    %c0_0 = arith.constant 0 : index
    %0 = vector.load %arg0[%c0, %c0_0] : memref<2x32xf32, #tpu.memory_space<vmem>>, vector<2x32xf32>
    %c0_1 = arith.constant 0 : index
    %c48 = arith.constant 48 : index
    %1 = vector.load %arg1[%c0_1, %c48] : memref<56x128xf32, #tpu.memory_space<vmem>>, vector<32x12xf32>
    %cst = arith.constant dense<0.000000e+00> : vector<2x12xf32>
    %2 = tpu.matmul %0, %1, %cst {dimension_numbers = #tpu.dot_dimension_numbers<[1], [0], [0], [1], [0, 0, 1, 1], [], []>} : vector<2x32xf32>, vector<32x12xf32>, vector<2x12xf32> -> vector<2x12xf32>
    %c48_2 = arith.constant 48 : index
    %c0_3 = arith.constant 0 : index
    %3 = vector.load %arg1[%c48_2, %c0_3] : memref<56x128xf32, #tpu.memory_space<vmem>>, vector<1x12xf32>
    %4 = vector.broadcast %3 : vector<1x12xf32> to vector<2x12xf32>
    %5 = arith.addf %2, %4 : vector<2x12xf32>
    %cst_4 = arith.constant 0.000000e+00 : f32
    %6 = vector.broadcast %cst_4 : f32 to vector<2x12xf32>
    %7 = arith.maximumf %5, %6 : vector<2x12xf32>
    %8 = tpu.concatenate %7, %7, %7, %7 in 0 : vector<2x12xf32>, vector<2x12xf32>, vector<2x12xf32>, vector<2x12xf32> -> vector<8x12xf32>
    %c0_5 = arith.constant 0 : index
    %c88 = arith.constant 88 : index
    %9 = vector.load %arg1[%c0_5, %c88] : memref<56x128xf32, #tpu.memory_space<vmem>>, vector<8x12xf32>
    %10 = arith.mulf %8, %9 : vector<8x12xf32>
    %c32 = arith.constant 32 : index
    %c0_6 = arith.constant 0 : index
    %11 = vector.load %arg1[%c32, %c0_6] : memref<56x128xf32, #tpu.memory_space<vmem>>, vector<12x128xf32>
    %cst_7 = arith.constant dense<0.000000e+00> : vector<8x128xf32>
    %12 = tpu.matmul %10, %11, %cst_7 {dimension_numbers = #tpu.dot_dimension_numbers<[1], [0], [0], [1], [0, 0, 1, 1], [], []>} : vector<8x12xf32>, vector<12x128xf32>, vector<8x128xf32> -> vector<8x128xf32>
    %13 = vector.extract_strided_slice %12 {offsets = [0, 0], sizes = [8, 32], strides = [1, 1]} : vector<8x128xf32> to vector<8x32xf32>
    %14 = vector.extract_strided_slice %12 {offsets = [0, 32], sizes = [8, 32], strides = [1, 1]} : vector<8x128xf32> to vector<8x32xf32>
    %15 = vector.extract_strided_slice %12 {offsets = [0, 64], sizes = [8, 32], strides = [1, 1]} : vector<8x128xf32> to vector<8x32xf32>
    %16 = vector.extract_strided_slice %12 {offsets = [0, 96], sizes = [8, 32], strides = [1, 1]} : vector<8x128xf32> to vector<8x32xf32>
    %17 = tpu.concatenate %13, %14, %15, %16 in 0 : vector<8x32xf32>, vector<8x32xf32>, vector<8x32xf32>, vector<8x32xf32> -> vector<32x32xf32>
    %c112 = arith.constant 112 : index
    %c80 = arith.constant 80 : index
    %18 = vector.load %arg2[%c112, %c80] : memref<176x162xbf16, #tpu.memory_space<vmem>>, vector<26x32xbf16>
    %19 = arith.extf %18 : vector<26x32xbf16> to vector<26x32xf32>
    %cst_8 = arith.constant dense<0.000000e+00> : vector<26x32xf32>
    %20 = tpu.matmul %19, %17, %cst_8 {dimension_numbers = #tpu.dot_dimension_numbers<[1], [0], [0], [1], [0, 0, 1, 1], [], []>} : vector<26x32xf32>, vector<32x32xf32>, vector<26x32xf32> -> vector<26x32xf32>
    %cst_9 = arith.constant dense<0.000000e+00> : vector<32xf32>
    %21 = vector.multi_reduction <add>, %20, %cst_9 [0] : vector<26x32xf32> to vector<32xf32>
    %22 = vector.shape_cast %21 : vector<32xf32> to vector<1x32xf32>
    %cst_10 = arith.constant 0.0384615399 : f32
    %23 = vector.broadcast %cst_10 : f32 to vector<1x32xf32>
    %24 = arith.mulf %22, %23 : vector<1x32xf32>
    %25 = vector.broadcast %24 : vector<1x32xf32> to vector<26x32xf32>
    %26 = arith.subf %20, %25 : vector<26x32xf32>
    %27 = arith.mulf %26, %26 : vector<26x32xf32>
    %cst_11 = arith.constant dense<0.000000e+00> : vector<32xf32>
    %28 = vector.multi_reduction <add>, %27, %cst_11 [0] : vector<26x32xf32> to vector<32xf32>
    %29 = vector.shape_cast %28 : vector<32xf32> to vector<1x32xf32>
    %cst_12 = arith.constant 0.0384615399 : f32
    %30 = vector.broadcast %cst_12 : f32 to vector<1x32xf32>
    %31 = arith.mulf %29, %30 : vector<1x32xf32>
    %c50 = arith.constant 50 : index
    %c0_13 = arith.constant 0 : index
    %32 = vector.load %arg1[%c50, %c0_13] : memref<56x128xf32, #tpu.memory_space<vmem>>, vector<1x32xf32>
    %cst_14 = arith.constant 9.99999974E-6 : f32
    %33 = vector.broadcast %cst_14 : f32 to vector<1x32xf32>
    %34 = arith.addf %31, %33 : vector<1x32xf32>
    %35 = math.rsqrt %34 : vector<1x32xf32>
    %36 = arith.mulf %32, %35 : vector<1x32xf32>
    %37 = vector.broadcast %36 : vector<1x32xf32> to vector<26x32xf32>
    %38 = arith.mulf %26, %37 : vector<26x32xf32>
    %c51 = arith.constant 51 : index
    %c0_15 = arith.constant 0 : index
    %39 = vector.load %arg1[%c51, %c0_15] : memref<56x128xf32, #tpu.memory_space<vmem>>, vector<1x32xf32>
    %40 = vector.broadcast %39 : vector<1x32xf32> to vector<26x32xf32>
    %41 = arith.addf %38, %40 : vector<26x32xf32>
    %cst_16 = arith.constant 0.000000e+00 : f32
    %42 = vector.broadcast %cst_16 : f32 to vector<26x32xf32>
    %43 = arith.maximumf %41, %42 : vector<26x32xf32>
    %c0_17 = arith.constant 0 : index
    %c0_18 = arith.constant 0 : index
    %44 = vector.load %arg1[%c0_17, %c0_18] : memref<56x128xf32, #tpu.memory_space<vmem>>, vector<32x48xf32>
    %cst_19 = arith.constant dense<0.000000e+00> : vector<26x48xf32>
    %45 = tpu.matmul %43, %44, %cst_19 {dimension_numbers = #tpu.dot_dimension_numbers<[1], [0], [0], [1], [0, 0, 1, 1], [], []>} : vector<26x32xf32>, vector<32x48xf32>, vector<26x48xf32> -> vector<26x48xf32>
    %46 = vector.extract_strided_slice %45 {offsets = [0, 0], sizes = [26, 16], strides = [1, 1]} : vector<26x48xf32> to vector<26x16xf32>
    %47 = vector.extract_strided_slice %45 {offsets = [0, 16], sizes = [26, 16], strides = [1, 1]} : vector<26x48xf32> to vector<26x16xf32>
    %48 = vector.extract_strided_slice %45 {offsets = [0, 32], sizes = [26, 16], strides = [1, 1]} : vector<26x48xf32> to vector<26x16xf32>
    %49 = tpu.concatenate %46, %47, %48 in 0 : vector<26x16xf32>, vector<26x16xf32>, vector<26x16xf32> -> vector<78x16xf32>
    %c112_20 = arith.constant 112 : index
    %c0_21 = arith.constant 0 : index
    %50 = vector.load %arg2[%c112_20, %c0_21] : memref<176x162xbf16, #tpu.memory_space<vmem>>, vector<54x78xbf16>
    %51 = arith.extf %50 : vector<54x78xbf16> to vector<54x78xf32>
    %cst_22 = arith.constant dense<0.000000e+00> : vector<54x16xf32>
    %52 = tpu.matmul %51, %49, %cst_22 {dimension_numbers = #tpu.dot_dimension_numbers<[1], [0], [0], [1], [0, 0, 1, 1], [], []>} : vector<54x78xf32>, vector<78x16xf32>, vector<54x16xf32> -> vector<54x16xf32>
    %cst_23 = arith.constant dense<0.000000e+00> : vector<16xf32>
    %53 = vector.multi_reduction <add>, %52, %cst_23 [0] : vector<54x16xf32> to vector<16xf32>
    %54 = vector.shape_cast %53 : vector<16xf32> to vector<1x16xf32>
    %cst_24 = arith.constant 0.0185185187 : f32
    %55 = vector.broadcast %cst_24 : f32 to vector<1x16xf32>
    %56 = arith.mulf %54, %55 : vector<1x16xf32>
    %57 = vector.broadcast %56 : vector<1x16xf32> to vector<54x16xf32>
    %58 = arith.subf %52, %57 : vector<54x16xf32>
    %59 = arith.mulf %58, %58 : vector<54x16xf32>
    %cst_25 = arith.constant dense<0.000000e+00> : vector<16xf32>
    %60 = vector.multi_reduction <add>, %59, %cst_25 [0] : vector<54x16xf32> to vector<16xf32>
    %61 = vector.shape_cast %60 : vector<16xf32> to vector<1x16xf32>
    %cst_26 = arith.constant 0.0185185187 : f32
    %62 = vector.broadcast %cst_26 : f32 to vector<1x16xf32>
    %63 = arith.mulf %61, %62 : vector<1x16xf32>
    %c52 = arith.constant 52 : index
    %c0_27 = arith.constant 0 : index
    %64 = vector.load %arg1[%c52, %c0_27] : memref<56x128xf32, #tpu.memory_space<vmem>>, vector<1x16xf32>
    %cst_28 = arith.constant 9.99999974E-6 : f32
    %65 = vector.broadcast %cst_28 : f32 to vector<1x16xf32>
    %66 = arith.addf %63, %65 : vector<1x16xf32>
    %67 = math.rsqrt %66 : vector<1x16xf32>
    %68 = arith.mulf %64, %67 : vector<1x16xf32>
    %69 = vector.broadcast %68 : vector<1x16xf32> to vector<54x16xf32>
    %70 = arith.mulf %58, %69 : vector<54x16xf32>
    %c53 = arith.constant 53 : index
    %c0_29 = arith.constant 0 : index
    %71 = vector.load %arg1[%c53, %c0_29] : memref<56x128xf32, #tpu.memory_space<vmem>>, vector<1x16xf32>
    %72 = vector.broadcast %71 : vector<1x16xf32> to vector<54x16xf32>
    %73 = arith.addf %70, %72 : vector<54x16xf32>
    %cst_30 = arith.constant 0.000000e+00 : f32
    %74 = vector.broadcast %cst_30 : f32 to vector<54x16xf32>
    %75 = arith.maximumf %73, %74 : vector<54x16xf32>
    %c0_31 = arith.constant 0 : index
    %c64 = arith.constant 64 : index
    %76 = vector.load %arg1[%c0_31, %c64] : memref<56x128xf32, #tpu.memory_space<vmem>>, vector<16x24xf32>
    %cst_32 = arith.constant dense<0.000000e+00> : vector<54x24xf32>
    %77 = tpu.matmul %75, %76, %cst_32 {dimension_numbers = #tpu.dot_dimension_numbers<[1], [0], [0], [1], [0, 0, 1, 1], [], []>} : vector<54x16xf32>, vector<16x24xf32>, vector<54x24xf32> -> vector<54x24xf32>
    %78 = vector.extract_strided_slice %77 {offsets = [0, 0], sizes = [54, 8], strides = [1, 1]} : vector<54x24xf32> to vector<54x8xf32>
    %79 = vector.extract_strided_slice %77 {offsets = [0, 8], sizes = [54, 8], strides = [1, 1]} : vector<54x24xf32> to vector<54x8xf32>
    %80 = vector.extract_strided_slice %77 {offsets = [0, 16], sizes = [54, 8], strides = [1, 1]} : vector<54x24xf32> to vector<54x8xf32>
    %81 = tpu.concatenate %78, %79, %80 in 0 : vector<54x8xf32>, vector<54x8xf32>, vector<54x8xf32> -> vector<162x8xf32>
    %c0_33 = arith.constant 0 : index
    %c0_34 = arith.constant 0 : index
    %82 = vector.load %arg2[%c0_33, %c0_34] : memref<176x162xbf16, #tpu.memory_space<vmem>>, vector<110x162xbf16>
    %83 = arith.extf %82 : vector<110x162xbf16> to vector<110x162xf32>
    %cst_35 = arith.constant dense<0.000000e+00> : vector<110x8xf32>
    %84 = tpu.matmul %83, %81, %cst_35 {dimension_numbers = #tpu.dot_dimension_numbers<[1], [0], [0], [1], [0, 0, 1, 1], [], []>} : vector<110x162xf32>, vector<162x8xf32>, vector<110x8xf32> -> vector<110x8xf32>
    %cst_36 = arith.constant dense<0.000000e+00> : vector<8xf32>
    %85 = vector.multi_reduction <add>, %84, %cst_36 [0] : vector<110x8xf32> to vector<8xf32>
    %86 = vector.shape_cast %85 : vector<8xf32> to vector<1x8xf32>
    %cst_37 = arith.constant 0.0090909088 : f32
    %87 = vector.broadcast %cst_37 : f32 to vector<1x8xf32>
    %88 = arith.mulf %86, %87 : vector<1x8xf32>
    %89 = vector.broadcast %88 : vector<1x8xf32> to vector<110x8xf32>
    %90 = arith.subf %84, %89 : vector<110x8xf32>
    %91 = arith.mulf %90, %90 : vector<110x8xf32>
    %cst_38 = arith.constant dense<0.000000e+00> : vector<8xf32>
    %92 = vector.multi_reduction <add>, %91, %cst_38 [0] : vector<110x8xf32> to vector<8xf32>
    %93 = vector.shape_cast %92 : vector<8xf32> to vector<1x8xf32>
    %cst_39 = arith.constant 0.0090909088 : f32
    %94 = vector.broadcast %cst_39 : f32 to vector<1x8xf32>
    %95 = arith.mulf %93, %94 : vector<1x8xf32>
    %c54 = arith.constant 54 : index
    %c0_40 = arith.constant 0 : index
    %96 = vector.load %arg1[%c54, %c0_40] : memref<56x128xf32, #tpu.memory_space<vmem>>, vector<1x8xf32>
    %cst_41 = arith.constant 9.99999974E-6 : f32
    %97 = vector.broadcast %cst_41 : f32 to vector<1x8xf32>
    %98 = arith.addf %95, %97 : vector<1x8xf32>
    %99 = math.rsqrt %98 : vector<1x8xf32>
    %100 = arith.mulf %96, %99 : vector<1x8xf32>
    %101 = vector.broadcast %100 : vector<1x8xf32> to vector<110x8xf32>
    %102 = arith.mulf %90, %101 : vector<110x8xf32>
    %c55 = arith.constant 55 : index
    %c0_42 = arith.constant 0 : index
    %103 = vector.load %arg1[%c55, %c0_42] : memref<56x128xf32, #tpu.memory_space<vmem>>, vector<1x8xf32>
    %104 = vector.broadcast %103 : vector<1x8xf32> to vector<110x8xf32>
    %105 = arith.addf %102, %104 : vector<110x8xf32>
    %cst_43 = arith.constant 0.000000e+00 : f32
    %106 = vector.broadcast %cst_43 : f32 to vector<110x8xf32>
    %107 = arith.maximumf %105, %106 : vector<110x8xf32>
    %c16 = arith.constant 16 : index
    %c64_44 = arith.constant 64 : index
    %108 = vector.load %arg1[%c16, %c64_44] : memref<56x128xf32, #tpu.memory_space<vmem>>, vector<8x9xf32>
    %cst_45 = arith.constant dense<0.000000e+00> : vector<110x9xf32>
    %109 = tpu.matmul %107, %108, %cst_45 {dimension_numbers = #tpu.dot_dimension_numbers<[1], [0], [0], [1], [0, 0, 1, 1], [], []>} : vector<110x8xf32>, vector<8x9xf32>, vector<110x9xf32> -> vector<110x9xf32>
    %110 = vector.extract_strided_slice %109 {offsets = [0, 0], sizes = [110, 3], strides = [1, 1]} : vector<110x9xf32> to vector<110x3xf32>
    %111 = vector.extract_strided_slice %109 {offsets = [0, 3], sizes = [110, 3], strides = [1, 1]} : vector<110x9xf32> to vector<110x3xf32>
    %112 = vector.extract_strided_slice %109 {offsets = [0, 6], sizes = [110, 3], strides = [1, 1]} : vector<110x9xf32> to vector<110x3xf32>
    %cst_46 = arith.constant 0.000000e+00 : f32
    %113 = vector.broadcast %cst_46 : f32 to vector<2x3xf32>
    %cst_47 = arith.constant 0.000000e+00 : f32
    %114 = vector.broadcast %cst_47 : f32 to vector<4x3xf32>
    %115 = tpu.concatenate %110, %114 in 0 : vector<110x3xf32>, vector<4x3xf32> -> vector<114x3xf32>
    %116 = tpu.concatenate %113, %111, %113 in 0 : vector<2x3xf32>, vector<110x3xf32>, vector<2x3xf32> -> vector<114x3xf32>
    %117 = arith.addf %115, %116 : vector<114x3xf32>
    %118 = tpu.concatenate %114, %112 in 0 : vector<4x3xf32>, vector<110x3xf32> -> vector<114x3xf32>
    %119 = arith.addf %117, %118 : vector<114x3xf32>
    %c49 = arith.constant 49 : index
    %c0_48 = arith.constant 0 : index
    %120 = vector.load %arg1[%c49, %c0_48] : memref<56x128xf32, #tpu.memory_space<vmem>>, vector<1x3xf32>
    %121 = vector.broadcast %120 : vector<1x3xf32> to vector<114x3xf32>
    %122 = arith.addf %119, %121 : vector<114x3xf32>
    %cst_49 = arith.constant 0.000000e+00 : f32
    %123 = vector.broadcast %cst_49 : f32 to vector<114x3xf32>
    %124 = arith.subf %123, %122 : vector<114x3xf32>
    %125 = math.exp %124 : vector<114x3xf32>
    %cst_50 = arith.constant 1.000000e+00 : f32
    %126 = vector.broadcast %cst_50 : f32 to vector<114x3xf32>
    %127 = arith.addf %126, %125 : vector<114x3xf32>
    %cst_51 = arith.constant 1.000000e+00 : f32
    %128 = vector.broadcast %cst_51 : f32 to vector<114x3xf32>
    %129 = arith.divf %128, %127 : vector<114x3xf32>
    %c0_52 = arith.constant 0 : index
    %c0_53 = arith.constant 0 : index
    %130 = vector.load %arg3[%c0_52, %c0_53] : memref<114x3xf32, #tpu.memory_space<vmem>>, vector<114x3xf32>
    tpu.vector_store %arg3[%c0_52, %c0_53], %129 {strides = array<i32>} : memref<114x3xf32, #tpu.memory_space<vmem>>, vector<114x3xf32>,
    return
  }
}

</mosaic_0001>

<llo_original>
// kernel: _pallas_forward.1
$region0: #{_pallas_forward.1}
  #allocation0 [shape = 'u32[]', space=smem, size = 0x4, offset = 0x4, fixed_abs, tag = 'smem constant byte address 0x4 - core index']
  #allocation1 [shape = 'u32[144,128]{1,0:T(1,128)}', space=vmem, size = 0x12000, scoped, tag = 'internal scratch']
  %s0 = inlined_call_operand.vmem [shape: f32[2,32], index: 0, kind: input, shape index: {}]
  %s1 = inlined_call_operand.vmem [shape: f32[56,128], index: 1, kind: input, shape index: {}]
  %s2 = inlined_call_operand.vmem [shape: bf16[176,162], index: 2, kind: input, shape index: {}]
  %s3 = inlined_call_operand.vmem [shape: f32[114,3], index: 3, kind: output, shape index: {}]
  %s4 = sld [smem:[#allocation0]]
  $region22: #{_pallas_forward.1} parent=0
    _
  %s6 = ssub.s32 1, %s4
  %s7 = scalar_select 0, %s6, %s4
  // Predicated region
  $region2: #{_pallas_forward.1} parent=0 // pred_check
    _
  $region3: #{_pallas_forward.1} parent=0 // pred_check_branch
    %9 = sbr.rel (0) target = $region5
  $region4: #{_pallas_forward.1} parent=0 // pred_region
    _
  $region5: #{_pallas_forward.1} parent=0 // pred_fallthru
    _
  // Predicated region
  $region6: #{_pallas_forward.1} parent=0 // pred_check
    _
  $region7: #{_pallas_forward.1} parent=0 // pred_check_branch
    %11 = sbr.rel (0) target = $region9
  $region8: #{_pallas_forward.1} parent=0 // pred_region
    _
  $region9: #{_pallas_forward.1} parent=0 // pred_fallthru
    _
  // Predicated region
  $region10: #{_pallas_forward.1} parent=0 // pred_check
    _
  $region11: #{_pallas_forward.1} parent=0 // pred_check_branch
    %13 = sbr.rel (0) target = $region13
  $region12: #{_pallas_forward.1} parent=0 // pred_region
    _
  $region13: #{_pallas_forward.1} parent=0 // pred_fallthru
    _
  %v14 = vld [vmem:[%s0] sm:$0x3]
  %v15 = vld [vmem:[%s1] sm:$0xff]
  %v16 = vld [vmem:[%s1 + $0x8] sm:$0xff]
  %v17 = vld [vmem:[%s1 + $0x10] sm:$0xff]
  %v18 = vld [vmem:[%s1 + $0x18] sm:$0xff]
  %v19 = vld [vmem:[%s1 + $0x30] sm:$0x1]
  %v20 = vlaneseq
  %v21 = vshrl.u32 %v20, 7
  %v22 = vsub.s32 0, %v21
  %v23 = vrot.slane %v19, %v22
  %28 = vrot.lane.b32.xlu0 %v15, 80
  %v29 = vpop.permute.xlu0 %28
  %30 = vrot.lane.b32.xlu0 %v16, 80
  %v31 = vpop.permute.xlu0 %30
  %32 = vrot.lane.b32.xlu0 %v17, 80
  %v33 = vpop.permute.xlu0 %32
  %34 = vrot.lane.b32.xlu0 %v18, 80
  %v35 = vpop.permute.xlu0 %34
  %vm40 = vcmask 261120
  %v42 = vsel %vm40, %v14, 0
  %44 = vmatprep.subr.mxu0 0.0
  %45 = vmatpush1.msra.mxu0 0.0
  %46 = vmatprep.subr.mxu0 0.0
  %47 = vmatpush1.msra.mxu0 0.0
  %48 = vmatprep.subr.mxu0 0.0
  %49 = vmatpush1.msra.mxu0 0.0
  %50 = vmatprep.subr.mxu0 0.0
  %51 = vmatpush1.msra.mxu0 0.0
  %52 = vmatprep.subr.mxu0 0.0
  %53 = vmatpush1.msra.mxu0 0.0
  %54 = vmatprep.subr.mxu0 0.0
  %55 = vmatpush1.msra.mxu0 0.0
  %56 = vmatprep.subr.mxu0 0.0
  %57 = vmatpush1.msra.mxu0 0.0
  %58 = vmatprep.subr.mxu0 0.0
  %59 = vmatpush1.msra.mxu0 0.0
  %60 = vmatprep.subr.mxu0 0.0
  %61 = vmatpush1.msra.mxu0 0.0
  %62 = vmatprep.subr.mxu0 0.0
  %63 = vmatpush1.msra.mxu0 0.0
  %64 = vmatprep.subr.mxu0 0.0
  %65 = vmatpush1.msra.mxu0 0.0
  %66 = vmatprep.subr.mxu0 0.0
  %67 = vmatpush1.msra.mxu0 0.0
  %68 = vmatprep.subr.mxu0 0.0
  %69 = vmatpush1.msra.mxu0 %v35
  %70 = vmatprep.subr.mxu0 0.0
  %71 = vmatpush1.msra.mxu0 %v33
  %72 = vmatprep.subr.mxu0 0.0
  %73 = vmatpush1.msra.mxu0 %v31
  %74 = vmatprep.subr.mxu0 0.0
  %75 = vmatpush1.msra.mxu0 %v29
  %76 = vmatprep.subr.mxu0 0.0
  %77 = vmatpush2.msra.mxu0 0.0
  %78 = vmatprep.subr.mxu0 0.0
  %79 = vmatpush2.msra.mxu0 0.0
  %80 = vmatprep.subr.mxu0 0.0
  %81 = vmatpush2.msra.mxu0 0.0
  %82 = vmatprep.subr.mxu0 0.0
  %83 = vmatpush2.msra.mxu0 0.0
  %84 = vmatprep.subr.mxu0 0.0
  %85 = vmatpush2.msra.mxu0 0.0
  %86 = vmatprep.subr.mxu0 0.0
  %87 = vmatpush2.msra.mxu0 0.0
  %88 = vmatprep.subr.mxu0 0.0
  %89 = vmatpush2.msra.mxu0 0.0
  %90 = vmatprep.subr.mxu0 0.0
  %91 = vmatpush2.msra.mxu0 0.0
  %92 = vmatprep.subr.mxu0 0.0
  %93 = vmatpush2.msra.mxu0 0.0
  %94 = vmatprep.subr.mxu0 0.0
  %95 = vmatpush2.msra.mxu0 0.0
  %96 = vmatprep.subr.mxu0 0.0
  %97 = vmatpush2.msra.mxu0 0.0
  %98 = vmatprep.subr.mxu0 0.0
  %99 = vmatpush2.msra.mxu0 0.0
  %100 = vmatprep.subr.mxu0 0.0
  %101 = vmatpush2.msra.mxu0 0.0
  %102 = vmatprep.subr.mxu0 0.0
  %103 = vmatpush2.msra.mxu0 0.0
  %104 = vmatprep.subr.mxu0 0.0
  %105 = vmatpush2.msra.mxu0 0.0
  %106 = vmatprep.subr.mxu0 0.0
  %107 = vmatpush2.msra.mxu0 0.0
  %108 = vmatprep.mubr.f32.mxu0 0.0
  %109 = vmatmul.mubr.f32.gmra.mxu0 %v42
  %v110 = vpop.f32.mrf.mxu0
  %v111 = vadd.f32 %v23, %v110
  %v112 = vpop.f32.mrf.mxu0
  %113 = vdwg.mxu0
  %v114 = vmax.f32 %v111, 0.0
  %v116 = vrot.slane %v114, 6
  %v118 = vrot.slane %v114, 4
  %v120 = vrot.slane %v114, 2
  %vm122 = vcmask 1041408
  %v123 = vsel %vm122, %v114, %v116
  %vm124 = vcmask 1043456
  %v125 = vsel %vm124, %v123, %v118
  %vm126 = vcmask 1045504
  %v127 = vsel %vm126, %v125, %v120
  %v128 = vld [vmem:[%s1] sm:$0xff]
  %130 = vrot.lane.b32.xlu0 %v128, 40
  %v131 = vpop.permute.xlu0 %130
  %v133 = vmul.f32 %v127, %v131
  %v134 = vld [vmem:[%s1 + $0x20] sm:$0xff]
  %v135 = vld [vmem:[%s1 + $0x28] sm:$0xf]
  %vm136 = vcmask 97280
  %v138 = vsel %vm136, %v133, 0
  %v141 = vsel %vm124, %v135, 0
  %143 = vmatprep.subr.mxu0 0.0
  %144 = vmatpush1.msra.mxu0 0.0
  %145 = vmatprep.subr.mxu0 0.0
  %146 = vmatpush1.msra.mxu0 0.0
  %147 = vmatprep.subr.mxu0 0.0
  %148 = vmatpush1.msra.mxu0 0.0
  %149 = vmatprep.subr.mxu0 0.0
  %150 = vmatpush1.msra.mxu0 0.0
  %151 = vmatprep.subr.mxu0 0.0
  %152 = vmatpush1.msra.mxu0 0.0
  %153 = vmatprep.subr.mxu0 0.0
  %154 = vmatpush1.msra.mxu0 0.0
  %155 = vmatprep.subr.mxu0 0.0
  %156 = vmatpush1.msra.mxu0 0.0
  %157 = vmatprep.subr.mxu0 0.0
  %158 = vmatpush1.msra.mxu0 0.0
  %159 = vmatprep.subr.mxu0 0.0
  %160 = vmatpush1.msra.mxu0 0.0
  %161 = vmatprep.subr.mxu0 0.0
  %162 = vmatpush1.msra.mxu0 0.0
  %163 = vmatprep.subr.mxu0 0.0
  %164 = vmatpush1.msra.mxu0 0.0
  %165 = vmatprep.subr.mxu0 0.0
  %166 = vmatpush1.msra.mxu0 0.0
  %167 = vmatprep.subr.mxu0 0.0
  %168 = vmatpush1.msra.mxu0 0.0
  %169 = vmatprep.subr.mxu0 0.0
  %170 = vmatpush1.msra.mxu0 0.0
  %171 = vmatprep.subr.mxu0 0.0
  %172 = vmatpush1.msra.mxu0 %v141
  %173 = vmatprep.subr.mxu0 0.0
  %174 = vmatpush1.msra.mxu0 %v134
  %175 = vmatprep.subr.mxu0 0.0
  %176 = vmatpush2.msra.mxu0 0.0
  %177 = vmatprep.subr.mxu0 0.0
  %178 = vmatpush2.msra.mxu0 0.0
  %179 = vmatprep.subr.mxu0 0.0
  %180 = vmatpush2.msra.mxu0 0.0
  %181 = vmatprep.subr.mxu0 0.0
  %182 = vmatpush2.msra.mxu0 0.0
  %183 = vmatprep.subr.mxu0 0.0
  %184 = vmatpush2.msra.mxu0 0.0
  %185 = vmatprep.subr.mxu0 0.0
  %186 = vmatpush2.msra.mxu0 0.0
  %187 = vmatprep.subr.mxu0 0.0
  %188 = vmatpush2.msra.mxu0 0.0
  %189 = vmatprep.subr.mxu0 0.0
  %190 = vmatpush2.msra.mxu0 0.0
  %191 = vmatprep.subr.mxu0 0.0
  %192 = vmatpush2.msra.mxu0 0.0
  %193 = vmatprep.subr.mxu0 0.0
  %194 = vmatpush2.msra.mxu0 0.0
  %195 = vmatprep.subr.mxu0 0.0
  %196 = vmatpush2.msra.mxu0 0.0
  %197 = vmatprep.subr.mxu0 0.0
  %198 = vmatpush2.msra.mxu0 0.0
  %199 = vmatprep.subr.mxu0 0.0
  %200 = vmatpush2.msra.mxu0 0.0
  %201 = vmatprep.subr.mxu0 0.0
  %202 = vmatpush2.msra.mxu0 0.0
  %203 = vmatprep.subr.mxu0 0.0
  %204 = vmatpush2.msra.mxu0 0.0
  %205 = vmatprep.subr.mxu0 0.0
  %206 = vmatpush2.msra.mxu0 0.0
  %207 = vmatprep.mubr.f32.mxu0 0.0
  %208 = vmatmul.mubr.f32.gmra.mxu0 %v138
  %v209 = vpop.f32.mrf.mxu0
  %v210 = vadd.f32 0.0, %v209
  %v211 = vpop.f32.mrf.mxu0
  %212 = vdwg.mxu0
  %214 = vrot.lane.b32.xlu0 %v210, 96
  %v215 = vpop.permute.xlu0 %214
  %217 = vrot.lane.b32.xlu0 %v210, 64
  %v218 = vpop.permute.xlu0 %217
  %220 = vrot.lane.b32.xlu0 %v210, 32
  %v221 = vpop.permute.xlu0 %220
  %v223 = vld [vmem:[%s2 + $0x70] sm:$0xf]
  %v224 = vld [vmem:[%s2 + $0x78] sm:$0xf]
  %v225 = vld [vmem:[%s2 + $0x80] sm:$0xf]
  %v226 = vld [vmem:[%s2 + $0x88] sm:$0x1]
  %v227 = vunpack.c.l.bf16 %v223
  %v228 = vunpack.c.l.bf16 %v224
  %v229 = vunpack.c.l.bf16 %v225
  %v230 = vunpack.c.l.bf16 %v226
  %235 = vrot.lane.b32.xlu0 %v227, 48
  %v236 = vpop.permute.xlu0 %235
  %237 = vrot.lane.b32.xlu0 %v228, 48
  %v238 = vpop.permute.xlu0 %237
  %239 = vrot.lane.b32.xlu0 %v229, 48
  %v240 = vpop.permute.xlu0 %239
  %241 = vrot.lane.b32.xlu0 %v230, 48
  %v242 = vpop.permute.xlu0 %241
  %v243 = vsel %vm40, %v236, 0
  %v245 = vsel %vm40, %v238, 0
  %v247 = vsel %vm40, %v240, 0
  %v249 = vsel %vm40, %v242, 0
  %251 = vmatprep.subr.mxu0 0.0
  %252 = vmatpush1.msra.mxu0 0.0
  %253 = vmatprep.subr.mxu0 0.0
  %254 = vmatpush1.msra.mxu0 0.0
  %255 = vmatprep.subr.mxu0 0.0
  %256 = vmatpush1.msra.mxu0 0.0
  %257 = vmatprep.subr.mxu0 0.0
  %258 = vmatpush1.msra.mxu0 0.0
  %259 = vmatprep.subr.mxu0 0.0
  %260 = vmatpush1.msra.mxu0 0.0
  %261 = vmatprep.subr.mxu0 0.0
  %262 = vmatpush1.msra.mxu0 0.0
  %263 = vmatprep.subr.mxu0 0.0
  %264 = vmatpush1.msra.mxu0 0.0
  %265 = vmatprep.subr.mxu0 0.0
  %266 = vmatpush1.msra.mxu0 0.0
  %267 = vmatprep.subr.mxu0 0.0
  %268 = vmatpush1.msra.mxu0 0.0
  %269 = vmatprep.subr.mxu0 0.0
  %270 = vmatpush1.msra.mxu0 0.0
  %271 = vmatprep.subr.mxu0 0.0
  %272 = vmatpush1.msra.mxu0 0.0
  %273 = vmatprep.subr.mxu0 0.0
  %274 = vmatpush1.msra.mxu0 0.0
  %275 = vmatprep.subr.mxu0 0.0
  %276 = vmatpush1.msra.mxu0 %v221
  %277 = vmatprep.subr.mxu0 0.0
  %278 = vmatpush1.msra.mxu0 %v218
  %279 = vmatprep.subr.mxu0 0.0
  %280 = vmatpush1.msra.mxu0 %v215
  %281 = vmatprep.subr.mxu0 0.0
  %282 = vmatpush1.msra.mxu0 %v210
  %283 = vmatprep.subr.mxu0 0.0
  %284 = vmatpush2.msra.mxu0 0.0
  %285 = vmatprep.subr.mxu0 0.0
  %286 = vmatpush2.msra.mxu0 0.0
  %287 = vmatprep.subr.mxu0 0.0
  %288 = vmatpush2.msra.mxu0 0.0
  %289 = vmatprep.subr.mxu0 0.0
  %290 = vmatpush2.msra.mxu0 0.0
  %291 = vmatprep.subr.mxu0 0.0
  %292 = vmatpush2.msra.mxu0 0.0
  %293 = vmatprep.subr.mxu0 0.0
  %294 = vmatpush2.msra.mxu0 0.0
  %295 = vmatprep.subr.mxu0 0.0
  %296 = vmatpush2.msra.mxu0 0.0
  %297 = vmatprep.subr.mxu0 0.0
  %298 = vmatpush2.msra.mxu0 0.0
  %299 = vmatprep.subr.mxu0 0.0
  %300 = vmatpush2.msra.mxu0 0.0
  %301 = vmatprep.subr.mxu0 0.0
  %302 = vmatpush2.msra.mxu0 0.0
  %303 = vmatprep.subr.mxu0 0.0
  %304 = vmatpush2.msra.mxu0 0.0
  %305 = vmatprep.subr.mxu0 0.0
  %306 = vmatpush2.msra.mxu0 0.0
  %307 = vmatprep.subr.mxu0 0.0
  %308 = vmatpush2.msra.mxu0 0.0
  %309 = vmatprep.subr.mxu0 0.0
  %310 = vmatpush2.msra.mxu0 0.0
  %311 = vmatprep.subr.mxu0 0.0
  %312 = vmatpush2.msra.mxu0 0.0
  %313 = vmatprep.subr.mxu0 0.0
  %314 = vmatpush2.msra.mxu0 0.0
  %315 = vmatprep.mubr.f32.mxu0 0.0
  %316 = vmatmul.mubr.f32.gmra.mxu0 %v243
  %v317 = vpop.f32.mrf.mxu0
  %v318 = vadd.f32 0.0, %v317
  %v319 = vpop.f32.mrf.mxu0
  %320 = vmatprep.mubr.f32.mxu0 0.0
  %321 = vmatmul.mubr.f32.gmra.mxu0 %v245
  %v322 = vpop.f32.mrf.mxu0
  %v323 = vadd.f32 0.0, %v322
  %v324 = vpop.f32.mrf.mxu0
  %325 = vmatprep.mubr.f32.mxu0 0.0
  %326 = vmatmul.mubr.f32.gmra.mxu0 %v247
  %v327 = vpop.f32.mrf.mxu0
  %v328 = vadd.f32 0.0, %v327
  %v329 = vpop.f32.mrf.mxu0
  %330 = vmatprep.mubr.f32.mxu0 0.0
  %331 = vmatmul.mubr.f32.gmra.mxu0 %v249
  %v332 = vpop.f32.mrf.mxu0
  %v333 = vadd.f32 0.0, %v332
  %v334 = vpop.f32.mrf.mxu0
  %335 = vdwg.mxu0
  %v336 = vsel %vm40, %v318, 0.0
  %v337 = vsel %vm40, %v323, 0.0
  %v338 = vadd.f32 %v336, %v337
  %v339 = vsel %vm40, %v328, 0.0
  %v340 = vadd.f32 %v338, %v339
  %vm341 = vcmask 254976
  %v342 = vsel %vm341, %v333, 0.0
  %v343 = vadd.f32 %v340, %v342
  %v344 = vrot.slane %v343, 4
  %v345 = vadd.f32 %v343, %v344
  %v346 = vrot.slane %v345, 2
  %v347 = vadd.f32 %v345, %v346
  %v348 = vrot.slane %v347, 1
  %v349 = vadd.f32 %v347, %v348
  %v350 = vmul.f32 %v349, 0.03846154
  %v351 = vsub.f32 %v318, %v350
  %v352 = vsub.f32 %v323, %v350
  %v353 = vsub.f32 %v328, %v350
  %v354 = vsub.f32 %v333, %v350
  %v355 = vmul.f32 %v351, %v351
  %v356 = vmul.f32 %v352, %v352
  %v357 = vmul.f32 %v353, %v353
  %v358 = vmul.f32 %v354, %v354
  %v359 = vsel %vm40, %v355, 0.0
  %v360 = vsel %vm40, %v356, 0.0
  %v361 = vadd.f32 %v359, %v360
  %v362 = vsel %vm40, %v357, 0.0
  %v363 = vadd.f32 %v361, %v362
  %v364 = vsel %vm341, %v358, 0.0
  %v365 = vadd.f32 %v363, %v364
  %v366 = vrot.slane %v365, 4
  %v367 = vadd.f32 %v365, %v366
  %v368 = vrot.slane %v367, 2
  %v369 = vadd.f32 %v367, %v368
  %v370 = vrot.slane %v369, 1
  %v371 = vadd.f32 %v369, %v370
  %v372 = vmul.f32 %v371, 0.03846154
  %v373 = vld [vmem:[%s1 + $0x32] sm:$0x1]
  %v374 = vadd.f32 %v372, 1e-05
  %v375 = vrsqrt.pop %v374
  %v376 = vmul.f32 %v373, %v375
  %v377 = vlaneseq
  %v378 = vshrl.u32 %v377, 7
  %v379 = vsub.s32 0, %v378
  %v380 = vrot.slane %v376, %v379
  %v381 = vmul.f32 %v351, %v380
  %v382 = vmul.f32 %v352, %v380
  %v383 = vmul.f32 %v353, %v380
  %v384 = vmul.f32 %v354, %v380
  %v385 = vld [vmem:[%s1 + $0x33] sm:$0x1]
  %v386 = vlaneseq
  %v387 = vshrl.u32 %v386, 7
  %v388 = vsub.s32 0, %v387
  %v389 = vrot.slane %v385, %v388
  %v390 = vadd.f32 %v381, %v389
  %v391 = vadd.f32 %v382, %v389
  %v392 = vadd.f32 %v383, %v389
  %v393 = vadd.f32 %v384, %v389
  %v394 = vmax.f32 %v390, 0.0
  %v395 = vmax.f32 %v391, 0.0
  %v396 = vmax.f32 %v392, 0.0
  %v397 = vmax.f32 %v393, 0.0
  %v399 = vsel %vm40, %v394, 0
  %v402 = vsel %vm40, %v395, 0
  %v405 = vsel %vm40, %v396, 0
  %v408 = vsel %vm40, %v397, 0
  %410 = vmatprep.subr.mxu0 0.0
  %411 = vmatpush1.msra.mxu0 0.0
  %412 = vmatprep.subr.mxu0 0.0
  %413 = vmatpush1.msra.mxu0 0.0
  %414 = vmatprep.subr.mxu0 0.0
  %415 = vmatpush1.msra.mxu0 0.0
  %416 = vmatprep.subr.mxu0 0.0
  %417 = vmatpush1.msra.mxu0 0.0
  %418 = vmatprep.subr.mxu0 0.0
  %419 = vmatpush1.msra.mxu0 0.0
  %420 = vmatprep.subr.mxu0 0.0
  %421 = vmatpush1.msra.mxu0 0.0
  %422 = vmatprep.subr.mxu0 0.0
  %423 = vmatpush1.msra.mxu0 0.0
  %424 = vmatprep.subr.mxu0 0.0
  %425 = vmatpush1.msra.mxu0 0.0
  %426 = vmatprep.subr.mxu0 0.0
  %427 = vmatpush1.msra.mxu0 0.0
  %428 = vmatprep.subr.mxu0 0.0
  %429 = vmatpush1.msra.mxu0 0.0
  %430 = vmatprep.subr.mxu0 0.0
  %431 = vmatpush1.msra.mxu0 0.0
  %432 = vmatprep.subr.mxu0 0.0
  %433 = vmatpush1.msra.mxu0 0.0
  %434 = vmatprep.subr.mxu0 0.0
  %435 = vmatpush1.msra.mxu0 %v18
  %436 = vmatprep.subr.mxu0 0.0
  %437 = vmatpush1.msra.mxu0 %v17
  %438 = vmatprep.subr.mxu0 0.0
  %439 = vmatpush1.msra.mxu0 %v16
  %440 = vmatprep.subr.mxu0 0.0
  %441 = vmatpush1.msra.mxu0 %v15
  %442 = vmatprep.subr.mxu0 0.0
  %443 = vmatpush2.msra.mxu0 0.0
  %444 = vmatprep.subr.mxu0 0.0
  %445 = vmatpush2.msra.mxu0 0.0
  %446 = vmatprep.subr.mxu0 0.0
  %447 = vmatpush2.msra.mxu0 0.0
  %448 = vmatprep.subr.mxu0 0.0
  %449 = vmatpush2.msra.mxu0 0.0
  %450 = vmatprep.subr.mxu0 0.0
  %451 = vmatpush2.msra.mxu0 0.0
  %452 = vmatprep.subr.mxu0 0.0
  %453 = vmatpush2.msra.mxu0 0.0
  %454 = vmatprep.subr.mxu0 0.0
  %455 = vmatpush2.msra.mxu0 0.0
  %456 = vmatprep.subr.mxu0 0.0
  %457 = vmatpush2.msra.mxu0 0.0
  %458 = vmatprep.subr.mxu0 0.0
  %459 = vmatpush2.msra.mxu0 0.0
  %460 = vmatprep.subr.mxu0 0.0
  %461 = vmatpush2.msra.mxu0 0.0
  %462 = vmatprep.subr.mxu0 0.0
  %463 = vmatpush2.msra.mxu0 0.0
  %464 = vmatprep.subr.mxu0 0.0
  %465 = vmatpush2.msra.mxu0 0.0
  %466 = vmatprep.subr.mxu0 0.0
  %467 = vmatpush2.msra.mxu0 0.0
  %468 = vmatprep.subr.mxu0 0.0
  %469 = vmatpush2.msra.mxu0 0.0
  %470 = vmatprep.subr.mxu0 0.0
  %471 = vmatpush2.msra.mxu0 0.0
  %472 = vmatprep.subr.mxu0 0.0
  %473 = vmatpush2.msra.mxu0 0.0
  %474 = vmatprep.mubr.f32.mxu0 0.0
  %475 = vmatmul.mubr.f32.gmra.mxu0 %v399
  %v476 = vpop.f32.mrf.mxu0
  %v477 = vadd.f32 0.0, %v476
  %v478 = vpop.f32.mrf.mxu0
  %479 = vmatprep.mubr.f32.mxu0 0.0
  %480 = vmatmul.mubr.f32.gmra.mxu0 %v402
  %v481 = vpop.f32.mrf.mxu0
  %v482 = vadd.f32 0.0, %v481
  %v483 = vpop.f32.mrf.mxu0
  %484 = vmatprep.mubr.f32.mxu0 0.0
  %485 = vmatmul.mubr.f32.gmra.mxu0 %v405
  %v486 = vpop.f32.mrf.mxu0
  %v487 = vadd.f32 0.0, %v486
  %v488 = vpop.f32.mrf.mxu0
  %489 = vmatprep.mubr.f32.mxu0 0.0
  %490 = vmatmul.mubr.f32.gmra.mxu0 %v408
  %v491 = vpop.f32.mrf.mxu0
  %v492 = vadd.f32 0.0, %v491
  %v493 = vpop.f32.mrf.mxu0
  %494 = vdwg.mxu0
  %v499 = vrot.slane %v477, 6
  %v500 = vrot.slane %v482, 6
  %v501 = vsel %vm122, %v499, %v500
  %v502 = vrot.slane %v487, 6
  %v503 = vsel %vm122, %v500, %v502
  %v504 = vrot.slane %v492, 6
  %v505 = vsel %vm122, %v502, %v504
  %506 = vrot.lane.b32.xlu0 %v499, 112
  %v507 = vpop.permute.xlu0 %506
  %508 = vrot.lane.b32.xlu0 %v501, 112
  %v509 = vpop.permute.xlu0 %508
  %510 = vrot.lane.b32.xlu0 %v503, 112
  %v511 = vpop.permute.xlu0 %510
  %512 = vrot.lane.b32.xlu0 %v505, 112
  %v513 = vpop.permute.xlu0 %512
  %v518 = vrot.slane %v477, 4
  %v519 = vrot.slane %v482, 4
  %v520 = vsel %vm124, %v518, %v519
  %v521 = vrot.slane %v487, 4
  %v522 = vsel %vm124, %v519, %v521
  %v523 = vrot.slane %v492, 4
  %v524 = vsel %vm124, %v521, %v523
  %525 = vrot.lane.b32.xlu0 %v518, 96
  %v526 = vpop.permute.xlu0 %525
  %527 = vrot.lane.b32.xlu0 %v520, 96
  %v528 = vpop.permute.xlu0 %527
  %529 = vrot.lane.b32.xlu0 %v522, 96
  %v530 = vpop.permute.xlu0 %529
  %531 = vrot.lane.b32.xlu0 %v524, 96
  %v532 = vpop.permute.xlu0 %531
  %v536 = vsel %vm122, %v492, %v507
  %v537 = vsel %vm124, %v513, %v526
  %v538 = vld [vmem:[%s2 + $0x70] sm:$0xf]
  %v539 = vld [vmem:[%s2 + $0x78] sm:$0xf]
  %v540 = vld [vmem:[%s2 + $0x80] sm:$0xf]
  %v541 = vld [vmem:[%s2 + $0x88] sm:$0xf]
  %v542 = vld [vmem:[%s2 + $0x90] sm:$0xf]
  %v543 = vld [vmem:[%s2 + $0x98] sm:$0xf]
  %v544 = vld [vmem:[%s2 + $0xa0] sm:$0x7]
  %v545 = vunpack.c.l.bf16 %v538
  %v546 = vunpack.c.l.bf16 %v539
  %v547 = vunpack.c.l.bf16 %v540
  %v548 = vunpack.c.l.bf16 %v541
  %v549 = vunpack.c.l.bf16 %v542
  %v550 = vunpack.c.l.bf16 %v543
  %v551 = vunpack.c.l.bf16 %v544
  %vm552 = vcmask 637952
  %v554 = vsel %vm552, %v545, 0
  %v557 = vsel %vm552, %v546, 0
  %v560 = vsel %vm552, %v547, 0
  %v563 = vsel %vm552, %v548, 0
  %v566 = vsel %vm552, %v549, 0
  %v569 = vsel %vm552, %v550, 0
  %v572 = vsel %vm552, %v551, 0
  %v574 = vsel %vm126, %v532, 0
  %576 = vmatprep.subr.mxu0 0.0
  %577 = vmatpush1.msra.mxu0 0.0
  %578 = vmatprep.subr.mxu0 0.0
  %579 = vmatpush1.msra.mxu0 0.0
  %580 = vmatprep.subr.mxu0 0.0
  %581 = vmatpush1.msra.mxu0 0.0
  %582 = vmatprep.subr.mxu0 0.0
  %583 = vmatpush1.msra.mxu0 0.0
  %584 = vmatprep.subr.mxu0 0.0
  %585 = vmatpush1.msra.mxu0 0.0
  %586 = vmatprep.subr.mxu0 0.0
  %587 = vmatpush1.msra.mxu0 0.0
  %588 = vmatprep.subr.mxu0 0.0
  %589 = vmatpush1.msra.mxu0 %v574
  %590 = vmatprep.subr.mxu0 0.0
  %591 = vmatpush1.msra.mxu0 %v530
  %592 = vmatprep.subr.mxu0 0.0
  %593 = vmatpush1.msra.mxu0 %v528
  %594 = vmatprep.subr.mxu0 0.0
  %595 = vmatpush1.msra.mxu0 %v537
  %596 = vmatprep.subr.mxu0 0.0
  %597 = vmatpush1.msra.mxu0 %v511
  %598 = vmatprep.subr.mxu0 0.0
  %599 = vmatpush1.msra.mxu0 %v509
  %600 = vmatprep.subr.mxu0 0.0
  %601 = vmatpush1.msra.mxu0 %v536
  %602 = vmatprep.subr.mxu0 0.0
  %603 = vmatpush1.msra.mxu0 %v487
  %604 = vmatprep.subr.mxu0 0.0
  %605 = vmatpush1.msra.mxu0 %v482
  %606 = vmatprep.subr.mxu0 0.0
  %607 = vmatpush1.msra.mxu0 %v477
  %608 = vmatprep.subr.mxu0 0.0
  %609 = vmatpush2.msra.mxu0 0.0
  %610 = vmatprep.subr.mxu0 0.0
  %611 = vmatpush2.msra.mxu0 0.0
  %612 = vmatprep.subr.mxu0 0.0
  %613 = vmatpush2.msra.mxu0 0.0
  %614 = vmatprep.subr.mxu0 0.0
  %615 = vmatpush2.msra.mxu0 0.0
  %616 = vmatprep.subr.mxu0 0.0
  %617 = vmatpush2.msra.mxu0 0.0
  %618 = vmatprep.subr.mxu0 0.0
  %619 = vmatpush2.msra.mxu0 0.0
  %620 = vmatprep.subr.mxu0 0.0
  %621 = vmatpush2.msra.mxu0 0.0
  %622 = vmatprep.subr.mxu0 0.0
  %623 = vmatpush2.msra.mxu0 0.0
  %624 = vmatprep.subr.mxu0 0.0
  %625 = vmatpush2.msra.mxu0 0.0
  %626 = vmatprep.subr.mxu0 0.0
  %627 = vmatpush2.msra.mxu0 0.0
  %628 = vmatprep.subr.mxu0 0.0
  %629 = vmatpush2.msra.mxu0 0.0
  %630 = vmatprep.subr.mxu0 0.0
  %631 = vmatpush2.msra.mxu0 0.0
  %632 = vmatprep.subr.mxu0 0.0
  %633 = vmatpush2.msra.mxu0 0.0
  %634 = vmatprep.subr.mxu0 0.0
  %635 = vmatpush2.msra.mxu0 0.0
  %636 = vmatprep.subr.mxu0 0.0
  %637 = vmatpush2.msra.mxu0 0.0
  %638 = vmatprep.subr.mxu0 0.0
  %639 = vmatpush2.msra.mxu0 0.0
  %640 = vmatprep.mubr.f32.mxu0 0.0
  %641 = vmatmul.mubr.f32.gmra.mxu0 %v554
  %v642 = vpop.f32.mrf.mxu0
  %v643 = vadd.f32 0.0, %v642
  %v644 = vpop.f32.mrf.mxu0
  %645 = vmatprep.mubr.f32.mxu0 0.0
  %646 = vmatmul.mubr.f32.gmra.mxu0 %v557
  %v647 = vpop.f32.mrf.mxu0
  %v648 = vadd.f32 0.0, %v647
  %v649 = vpop.f32.mrf.mxu0
  %650 = vmatprep.mubr.f32.mxu0 0.0
  %651 = vmatmul.mubr.f32.gmra.mxu0 %v560
  %v652 = vpop.f32.mrf.mxu0
  %v653 = vadd.f32 0.0, %v652
  %v654 = vpop.f32.mrf.mxu0
  %655 = vmatprep.mubr.f32.mxu0 0.0
  %656 = vmatmul.mubr.f32.gmra.mxu0 %v563
  %v657 = vpop.f32.mrf.mxu0
  %v658 = vadd.f32 0.0, %v657
  %v659 = vpop.f32.mrf.mxu0
  %660 = vmatprep.mubr.f32.mxu0 0.0
  %661 = vmatmul.mubr.f32.gmra.mxu0 %v566
  %v662 = vpop.f32.mrf.mxu0
  %v663 = vadd.f32 0.0, %v662
  %v664 = vpop.f32.mrf.mxu0
  %665 = vmatprep.mubr.f32.mxu0 0.0
  %666 = vmatmul.mubr.f32.gmra.mxu0 %v569
  %v667 = vpop.f32.mrf.mxu0
  %v668 = vadd.f32 0.0, %v667
  %v669 = vpop.f32.mrf.mxu0
  %670 = vmatprep.mubr.f32.mxu0 0.0
  %671 = vmatmul.mubr.f32.gmra.mxu0 %v572
  %v672 = vpop.f32.mrf.mxu0
  %v673 = vadd.f32 0.0, %v672
  %v674 = vpop.f32.mrf.mxu0
  %675 = vdwg.mxu0
  %vm676 = vcmask 130048
  %v677 = vsel %vm676, %v643, 0.0
  %v678 = vsel %vm676, %v648, 0.0
  %v679 = vadd.f32 %v677, %v678
  %v680 = vsel %vm676, %v653, 0.0
  %v681 = vadd.f32 %v679, %v680
  %v682 = vsel %vm676, %v658, 0.0
  %v683 = vadd.f32 %v681, %v682
  %v684 = vsel %vm676, %v663, 0.0
  %v685 = vadd.f32 %v683, %v684
  %v686 = vsel %vm676, %v668, 0.0
  %v687 = vadd.f32 %v685, %v686
  %vm688 = vcmask 128000
  %v689 = vsel %vm688, %v673, 0.0
  %v690 = vadd.f32 %v687, %v689
  %v691 = vrot.slane %v690, 4
  %v692 = vadd.f32 %v690, %v691
  %v693 = vrot.slane %v692, 2
  %v694 = vadd.f32 %v692, %v693
  %v695 = vrot.slane %v694, 1
  %v696 = vadd.f32 %v694, %v695
  %v697 = vmul.f32 %v696, 0.018518519
  %v698 = vsub.f32 %v643, %v697
  %v699 = vsub.f32 %v648, %v697
  %v700 = vsub.f32 %v653, %v697
  %v701 = vsub.f32 %v658, %v697
  %v702 = vsub.f32 %v663, %v697
  %v703 = vsub.f32 %v668, %v697
  %v704 = vsub.f32 %v673, %v697
  %v705 = vmul.f32 %v698, %v698
  %v706 = vmul.f32 %v699, %v699
  %v707 = vmul.f32 %v700, %v700
  %v708 = vmul.f32 %v701, %v701
  %v709 = vmul.f32 %v702, %v702
  %v710 = vmul.f32 %v703, %v703
  %v711 = vmul.f32 %v704, %v704
  %v712 = vsel %vm676, %v705, 0.0
  %v713 = vsel %vm676, %v706, 0.0
  %v714 = vadd.f32 %v712, %v713
  %v715 = vsel %vm676, %v707, 0.0
  %v716 = vadd.f32 %v714, %v715
  %v717 = vsel %vm676, %v708, 0.0
  %v718 = vadd.f32 %v716, %v717
  %v719 = vsel %vm676, %v709, 0.0
  %v720 = vadd.f32 %v718, %v719
  %v721 = vsel %vm676, %v710, 0.0
  %v722 = vadd.f32 %v720, %v721
  %v723 = vsel %vm688, %v711, 0.0
  %v724 = vadd.f32 %v722, %v723
  %v725 = vrot.slane %v724, 4
  %v726 = vadd.f32 %v724, %v725
  %v727 = vrot.slane %v726, 2
  %v728 = vadd.f32 %v726, %v727
  %v729 = vrot.slane %v728, 1
  %v730 = vadd.f32 %v728, %v729
  %v731 = vmul.f32 %v730, 0.018518519
  %v732 = vld [vmem:[%s1 + $0x34] sm:$0x1]
  %v733 = vadd.f32 %v731, 1e-05
  %v734 = vrsqrt.pop %v733
  %v735 = vmul.f32 %v732, %v734
  %v736 = vlaneseq
  %v737 = vshrl.u32 %v736, 7
  %v738 = vsub.s32 0, %v737
  %v739 = vrot.slane %v735, %v738
  %v740 = vmul.f32 %v698, %v739
  %v741 = vmul.f32 %v699, %v739
  %v742 = vmul.f32 %v700, %v739
  %v743 = vmul.f32 %v701, %v739
  %v744 = vmul.f32 %v702, %v739
  %v745 = vmul.f32 %v703, %v739
  %v746 = vmul.f32 %v704, %v739
  %v747 = vld [vmem:[%s1 + $0x35] sm:$0x1]
  %v748 = vlaneseq
  %v749 = vshrl.u32 %v748, 7
  %v750 = vsub.s32 0, %v749
  %v751 = vrot.slane %v747, %v750
  %v752 = vadd.f32 %v740, %v751
  %v753 = vadd.f32 %v741, %v751
  %v754 = vadd.f32 %v742, %v751
  %v755 = vadd.f32 %v743, %v751
  %v756 = vadd.f32 %v744, %v751
  %v757 = vadd.f32 %v745, %v751
  %v758 = vadd.f32 %v746, %v751
  %v759 = vmax.f32 %v752, 0.0
  %v760 = vmax.f32 %v753, 0.0
  %v761 = vmax.f32 %v754, 0.0
  %v762 = vmax.f32 %v755, 0.0
  %v763 = vmax.f32 %v756, 0.0
  %v764 = vmax.f32 %v757, 0.0
  %v765 = vmax.f32 %v758, 0.0
  %v766 = vld [vmem:[%s1] sm:$0xff]
  %v767 = vld [vmem:[%s1 + $0x8] sm:$0xff]
  %770 = vrot.lane.b32.xlu0 %v766, 64
  %v771 = vpop.permute.xlu0 %770
  %772 = vrot.lane.b32.xlu0 %v767, 64
  %v773 = vpop.permute.xlu0 %772
  %v777 = vsel %vm676, %v759, 0
  %v780 = vsel %vm676, %v760, 0
  %v783 = vsel %vm676, %v761, 0
  %v786 = vsel %vm676, %v762, 0
  %v789 = vsel %vm676, %v763, 0
  %v792 = vsel %vm676, %v764, 0
  %v795 = vsel %vm676, %v765, 0
  %797 = vmatprep.subr.mxu0 0.0
  %798 = vmatpush1.msra.mxu0 0.0
  %799 = vmatprep.subr.mxu0 0.0
  %800 = vmatpush1.msra.mxu0 0.0
  %801 = vmatprep.subr.mxu0 0.0
  %802 = vmatpush1.msra.mxu0 0.0
  %803 = vmatprep.subr.mxu0 0.0
  %804 = vmatpush1.msra.mxu0 0.0
  %805 = vmatprep.subr.mxu0 0.0
  %806 = vmatpush1.msra.mxu0 0.0
  %807 = vmatprep.subr.mxu0 0.0
  %808 = vmatpush1.msra.mxu0 0.0
  %809 = vmatprep.subr.mxu0 0.0
  %810 = vmatpush1.msra.mxu0 0.0
  %811 = vmatprep.subr.mxu0 0.0
  %812 = vmatpush1.msra.mxu0 0.0
  %813 = vmatprep.subr.mxu0 0.0
  %814 = vmatpush1.msra.mxu0 0.0
  %815 = vmatprep.subr.mxu0 0.0
  %816 = vmatpush1.msra.mxu0 0.0
  %817 = vmatprep.subr.mxu0 0.0
  %818 = vmatpush1.msra.mxu0 0.0
  %819 = vmatprep.subr.mxu0 0.0
  %820 = vmatpush1.msra.mxu0 0.0
  %821 = vmatprep.subr.mxu0 0.0
  %822 = vmatpush1.msra.mxu0 0.0
  %823 = vmatprep.subr.mxu0 0.0
  %824 = vmatpush1.msra.mxu0 0.0
  %825 = vmatprep.subr.mxu0 0.0
  %826 = vmatpush1.msra.mxu0 %v773
  %827 = vmatprep.subr.mxu0 0.0
  %828 = vmatpush1.msra.mxu0 %v771
  %829 = vmatprep.subr.mxu0 0.0
  %830 = vmatpush2.msra.mxu0 0.0
  %831 = vmatprep.subr.mxu0 0.0
  %832 = vmatpush2.msra.mxu0 0.0
  %833 = vmatprep.subr.mxu0 0.0
  %834 = vmatpush2.msra.mxu0 0.0
  %835 = vmatprep.subr.mxu0 0.0
  %836 = vmatpush2.msra.mxu0 0.0
  %837 = vmatprep.subr.mxu0 0.0
  %838 = vmatpush2.msra.mxu0 0.0
  %839 = vmatprep.subr.mxu0 0.0
  %840 = vmatpush2.msra.mxu0 0.0
  %841 = vmatprep.subr.mxu0 0.0
  %842 = vmatpush2.msra.mxu0 0.0
  %843 = vmatprep.subr.mxu0 0.0
  %844 = vmatpush2.msra.mxu0 0.0
  %845 = vmatprep.subr.mxu0 0.0
  %846 = vmatpush2.msra.mxu0 0.0
  %847 = vmatprep.subr.mxu0 0.0
  %848 = vmatpush2.msra.mxu0 0.0
  %849 = vmatprep.subr.mxu0 0.0
  %850 = vmatpush2.msra.mxu0 0.0
  %851 = vmatprep.subr.mxu0 0.0
  %852 = vmatpush2.msra.mxu0 0.0
  %853 = vmatprep.subr.mxu0 0.0
  %854 = vmatpush2.msra.mxu0 0.0
  %855 = vmatprep.subr.mxu0 0.0
  %856 = vmatpush2.msra.mxu0 0.0
  %857 = vmatprep.subr.mxu0 0.0
  %858 = vmatpush2.msra.mxu0 0.0
  %859 = vmatprep.subr.mxu0 0.0
  %860 = vmatpush2.msra.mxu0 0.0
  %861 = vmatprep.mubr.f32.mxu0 0.0
  %862 = vmatmul.mubr.f32.gmra.mxu0 %v777
  %v863 = vpop.f32.mrf.mxu0
  %v864 = vadd.f32 0.0, %v863
  %v865 = vpop.f32.mrf.mxu0
  %866 = vmatprep.mubr.f32.mxu0 0.0
  %867 = vmatmul.mubr.f32.gmra.mxu0 %v780
  %v868 = vpop.f32.mrf.mxu0
  %v869 = vadd.f32 0.0, %v868
  %v870 = vpop.f32.mrf.mxu0
  %871 = vmatprep.mubr.f32.mxu0 0.0
  %872 = vmatmul.mubr.f32.gmra.mxu0 %v783
  %v873 = vpop.f32.mrf.mxu0
  %v874 = vadd.f32 0.0, %v873
  %v875 = vpop.f32.mrf.mxu0
  %876 = vmatprep.mubr.f32.mxu0 0.0
  %877 = vmatmul.mubr.f32.gmra.mxu0 %v786
  %v878 = vpop.f32.mrf.mxu0
  %v879 = vadd.f32 0.0, %v878
  %v880 = vpop.f32.mrf.mxu0
  %881 = vmatprep.mubr.f32.mxu0 0.0
  %882 = vmatmul.mubr.f32.gmra.mxu0 %v789
  %v883 = vpop.f32.mrf.mxu0
  %v884 = vadd.f32 0.0, %v883
  %v885 = vpop.f32.mrf.mxu0
  %886 = vmatprep.mubr.f32.mxu0 0.0
  %887 = vmatmul.mubr.f32.gmra.mxu0 %v792
  %v888 = vpop.f32.mrf.mxu0
  %v889 = vadd.f32 0.0, %v888
  %v890 = vpop.f32.mrf.mxu0
  %891 = vmatprep.mubr.f32.mxu0 0.0
  %892 = vmatmul.mubr.f32.gmra.mxu0 %v795
  %v893 = vpop.f32.mrf.mxu0
  %v894 = vadd.f32 0.0, %v893
  %v895 = vpop.f32.mrf.mxu0
  %896 = vdwg.mxu0
  %v904 = vrot.slane %v864, 2
  %v905 = vrot.slane %v869, 2
  %v906 = vsel %vm126, %v904, %v905
  %v907 = vrot.slane %v874, 2
  %v908 = vsel %vm126, %v905, %v907
  %v909 = vrot.slane %v879, 2
  %v910 = vsel %vm126, %v907, %v909
  %v911 = vrot.slane %v884, 2
  %v912 = vsel %vm126, %v909, %v911
  %v913 = vrot.slane %v889, 2
  %v914 = vsel %vm126, %v911, %v913
  %v915 = vrot.slane %v894, 2
  %v916 = vsel %vm126, %v913, %v915
  %917 = vrot.lane.b32.xlu0 %v904, 120
  %v918 = vpop.permute.xlu0 %917
  %919 = vrot.lane.b32.xlu0 %v906, 120
  %v920 = vpop.permute.xlu0 %919
  %921 = vrot.lane.b32.xlu0 %v908, 120
  %v922 = vpop.permute.xlu0 %921
  %923 = vrot.lane.b32.xlu0 %v910, 120
  %v924 = vpop.permute.xlu0 %923
  %925 = vrot.lane.b32.xlu0 %v912, 120
  %v926 = vpop.permute.xlu0 %925
  %927 = vrot.lane.b32.xlu0 %v914, 120
  %v928 = vpop.permute.xlu0 %927
  %929 = vrot.lane.b32.xlu0 %v916, 120
  %v930 = vpop.permute.xlu0 %929
  %931 = vrot.lane.b32.xlu0 %v915, 120
  %v932 = vpop.permute.xlu0 %931
  %v941 = vrot.slane %v864, 4
  %v942 = vrot.slane %v869, 4
  %v943 = vsel %vm124, %v941, %v942
  %v944 = vrot.slane %v874, 4
  %v945 = vsel %vm124, %v942, %v944
  %v946 = vrot.slane %v879, 4
  %v947 = vsel %vm124, %v944, %v946
  %v948 = vrot.slane %v884, 4
  %v949 = vsel %vm124, %v946, %v948
  %v950 = vrot.slane %v889, 4
  %v951 = vsel %vm124, %v948, %v950
  %v952 = vrot.slane %v894, 4
  %v953 = vsel %vm124, %v950, %v952
  %954 = vrot.lane.b32.xlu0 %v941, 112
  %v955 = vpop.permute.xlu0 %954
  %956 = vrot.lane.b32.xlu0 %v943, 112
  %v957 = vpop.permute.xlu0 %956
  %958 = vrot.lane.b32.xlu0 %v945, 112
  %v959 = vpop.permute.xlu0 %958
  %960 = vrot.lane.b32.xlu0 %v947, 112
  %v961 = vpop.permute.xlu0 %960
  %962 = vrot.lane.b32.xlu0 %v949, 112
  %v963 = vpop.permute.xlu0 %962
  %964 = vrot.lane.b32.xlu0 %v951, 112
  %v965 = vpop.permute.xlu0 %964
  %966 = vrot.lane.b32.xlu0 %v953, 112
  %v967 = vpop.permute.xlu0 %966
  %968 = vrot.lane.b32.xlu0 %v952, 112
  %v969 = vpop.permute.xlu0 %968
  %v977 = vsel %vm126, %v894, %v918
  %v978 = vsel %vm124, %v932, %v955
  %v979 = vld [vmem:[%s2] sm:$0xff]
  %v980 = vld [vmem:[%s2 + $0x8] sm:$0xff]
  %v981 = vld [vmem:[%s2 + $0x10] sm:$0xff]
  %v982 = vld [vmem:[%s2 + $0x18] sm:$0xff]
  %v983 = vld [vmem:[%s2 + $0x20] sm:$0xff]
  %v984 = vld [vmem:[%s2 + $0x28] sm:$0xff]
  %v985 = vld [vmem:[%s2 + $0x30] sm:$0xff]
  %v986 = vld [vmem:[%s2 + $0x38] sm:$0xff]
  %v987 = vld [vmem:[%s2 + $0x40] sm:$0xff]
  %v988 = vld [vmem:[%s2 + $0x48] sm:$0xff]
  %v989 = vld [vmem:[%s2 + $0x50] sm:$0xff]
  %v990 = vld [vmem:[%s2 + $0x58] sm:$0xff]
  %v991 = vld [vmem:[%s2 + $0x60] sm:$0xff]
  %v992 = vld [vmem:[%s2 + $0x68] sm:$0x77]
  %v993 = vunpack.c.l.bf16 %v979
  %v994 = vunpack.c.h.bf16 %v979
  %v995 = vunpack.c.l.bf16 %v980
  %v996 = vunpack.c.h.bf16 %v980
  %v997 = vunpack.c.l.bf16 %v981
  %v998 = vunpack.c.h.bf16 %v981
  %v999 = vunpack.c.l.bf16 %v982
  %v1000 = vunpack.c.h.bf16 %v982
  %v1001 = vunpack.c.l.bf16 %v983
  %v1002 = vunpack.c.h.bf16 %v983
  %v1003 = vunpack.c.l.bf16 %v984
  %v1004 = vunpack.c.h.bf16 %v984
  %v1005 = vunpack.c.l.bf16 %v985
  %v1006 = vunpack.c.h.bf16 %v985
  %v1007 = vunpack.c.l.bf16 %v986
  %v1008 = vunpack.c.h.bf16 %v986
  %v1009 = vunpack.c.l.bf16 %v987
  %v1010 = vunpack.c.h.bf16 %v987
  %v1011 = vunpack.c.l.bf16 %v988
  %v1012 = vunpack.c.h.bf16 %v988
  %v1013 = vunpack.c.l.bf16 %v989
  %v1014 = vunpack.c.h.bf16 %v989
  %v1015 = vunpack.c.l.bf16 %v990
  %v1016 = vunpack.c.h.bf16 %v990
  %v1017 = vunpack.c.l.bf16 %v991
  %v1018 = vunpack.c.h.bf16 %v991
  %v1019 = vunpack.c.l.bf16 %v992
  %v1020 = vunpack.c.h.bf16 %v992
  %vm1021 = vcmask 277504
  %v1023 = vsel %vm1021, %v994, 0
  %v1026 = vsel %vm1021, %v996, 0
  %v1029 = vsel %vm1021, %v998, 0
  %v1032 = vsel %vm1021, %v1000, 0
  %v1035 = vsel %vm1021, %v1002, 0
  %v1038 = vsel %vm1021, %v1004, 0
  %v1041 = vsel %vm1021, %v1006, 0
  %v1044 = vsel %vm1021, %v1008, 0
  %v1047 = vsel %vm1021, %v1010, 0
  %v1050 = vsel %vm1021, %v1012, 0
  %v1053 = vsel %vm1021, %v1014, 0
  %v1056 = vsel %vm1021, %v1016, 0
  %v1059 = vsel %vm1021, %v1018, 0
  %v1062 = vsel %vm1021, %v1020, 0
  %v1064 = vsel %vm122, %v969, 0
  %1066 = vmatprep.subr.mxu0 0.0
  %1067 = vmatpush1.msra.mxu0 %v959
  %1068 = vmatprep.subr.mxu0 0.0
  %1069 = vmatpush1.msra.mxu0 %v957
  %1070 = vmatprep.subr.mxu0 0.0
  %1071 = vmatpush1.msra.mxu0 %v978
  %1072 = vmatprep.subr.mxu0 0.0
  %1073 = vmatpush1.msra.mxu0 %v930
  %1074 = vmatprep.subr.mxu0 0.0
  %1075 = vmatpush1.msra.mxu0 %v928
  %1076 = vmatprep.subr.mxu0 0.0
  %1077 = vmatpush1.msra.mxu0 %v926
  %1078 = vmatprep.subr.mxu0 0.0
  %1079 = vmatpush1.msra.mxu0 %v924
  %1080 = vmatprep.subr.mxu0 0.0
  %1081 = vmatpush1.msra.mxu0 %v922
  %1082 = vmatprep.subr.mxu0 0.0
  %1083 = vmatpush1.msra.mxu0 %v920
  %1084 = vmatprep.subr.mxu0 0.0
  %1085 = vmatpush1.msra.mxu0 %v977
  %1086 = vmatprep.subr.mxu0 0.0
  %1087 = vmatpush1.msra.mxu0 %v889
  %1088 = vmatprep.subr.mxu0 0.0
  %1089 = vmatpush1.msra.mxu0 %v884
  %1090 = vmatprep.subr.mxu0 0.0
  %1091 = vmatpush1.msra.mxu0 %v879
  %1092 = vmatprep.subr.mxu0 0.0
  %1093 = vmatpush1.msra.mxu0 %v874
  %1094 = vmatprep.subr.mxu0 0.0
  %1095 = vmatpush1.msra.mxu0 %v869
  %1096 = vmatprep.subr.mxu0 0.0
  %1097 = vmatpush1.msra.mxu0 %v864
  %1098 = vmatprep.subr.mxu0 0.0
  %1099 = vmatpush2.msra.mxu0 0.0
  %1100 = vmatprep.subr.mxu0 0.0
  %1101 = vmatpush2.msra.mxu0 0.0
  %1102 = vmatprep.subr.mxu0 0.0
  %1103 = vmatpush2.msra.mxu0 0.0
  %1104 = vmatprep.subr.mxu0 0.0
  %1105 = vmatpush2.msra.mxu0 0.0
  %1106 = vmatprep.subr.mxu0 0.0
  %1107 = vmatpush2.msra.mxu0 0.0
  %1108 = vmatprep.subr.mxu0 0.0
  %1109 = vmatpush2.msra.mxu0 0.0
  %1110 = vmatprep.subr.mxu0 0.0
  %1111 = vmatpush2.msra.mxu0 0.0
  %1112 = vmatprep.subr.mxu0 0.0
  %1113 = vmatpush2.msra.mxu0 0.0
  %1114 = vmatprep.subr.mxu0 0.0
  %1115 = vmatpush2.msra.mxu0 0.0
  %1116 = vmatprep.subr.mxu0 0.0
  %1117 = vmatpush2.msra.mxu0 0.0
  %1118 = vmatprep.subr.mxu0 0.0
  %1119 = vmatpush2.msra.mxu0 0.0
  %1120 = vmatprep.subr.mxu0 0.0
  %1121 = vmatpush2.msra.mxu0 %v1064
  %1122 = vmatprep.subr.mxu0 0.0
  %1123 = vmatpush2.msra.mxu0 %v967
  %1124 = vmatprep.subr.mxu0 0.0
  %1125 = vmatpush2.msra.mxu0 %v965
  %1126 = vmatprep.subr.mxu0 0.0
  %1127 = vmatpush2.msra.mxu0 %v963
  %1128 = vmatprep.subr.mxu0 0.0
  %1129 = vmatpush2.msra.mxu0 %v961
  %1130 = vmatprep.mubr.f32.mxu0 %v1023
  %1131 = vmatmul.mubr.f32.gmra.mxu0 %v993
  %v1132 = vpop.f32.mrf.mxu0
  %v1133 = vadd.f32 0.0, %v1132
  %v1134 = vpop.f32.mrf.mxu0
  %1135 = vmatprep.mubr.f32.mxu0 %v1026
  %1136 = vmatmul.mubr.f32.gmra.mxu0 %v995
  %v1137 = vpop.f32.mrf.mxu0
  %v1138 = vadd.f32 0.0, %v1137
  %v1139 = vpop.f32.mrf.mxu0
  %1140 = vmatprep.mubr.f32.mxu0 %v1029
  %1141 = vmatmul.mubr.f32.gmra.mxu0 %v997
  %v1142 = vpop.f32.mrf.mxu0
  %v1143 = vadd.f32 0.0, %v1142
  %v1144 = vpop.f32.mrf.mxu0
  %1145 = vmatprep.mubr.f32.mxu0 %v1032
  %1146 = vmatmul.mubr.f32.gmra.mxu0 %v999
  %v1147 = vpop.f32.mrf.mxu0
  %v1148 = vadd.f32 0.0, %v1147
  %v1149 = vpop.f32.mrf.mxu0
  %1150 = vmatprep.mubr.f32.mxu0 %v1035
  %1151 = vmatmul.mubr.f32.gmra.mxu0 %v1001
  %v1152 = vpop.f32.mrf.mxu0
  %v1153 = vadd.f32 0.0, %v1152
  %v1154 = vpop.f32.mrf.mxu0
  %1155 = vmatprep.mubr.f32.mxu0 %v1038
  %1156 = vmatmul.mubr.f32.gmra.mxu0 %v1003
  %v1157 = vpop.f32.mrf.mxu0
  %v1158 = vadd.f32 0.0, %v1157
  %v1159 = vpop.f32.mrf.mxu0
  %1160 = vmatprep.mubr.f32.mxu0 %v1041
  %1161 = vmatmul.mubr.f32.gmra.mxu0 %v1005
  %v1162 = vpop.f32.mrf.mxu0
  %v1163 = vadd.f32 0.0, %v1162
  %v1164 = vpop.f32.mrf.mxu0
  %1165 = vmatprep.mubr.f32.mxu0 %v1044
  %1166 = vmatmul.mubr.f32.gmra.mxu0 %v1007
  %v1167 = vpop.f32.mrf.mxu0
  %v1168 = vadd.f32 0.0, %v1167
  %v1169 = vpop.f32.mrf.mxu0
  %1170 = vmatprep.mubr.f32.mxu0 %v1047
  %1171 = vmatmul.mubr.f32.gmra.mxu0 %v1009
  %v1172 = vpop.f32.mrf.mxu0
  %v1173 = vadd.f32 0.0, %v1172
  %v1174 = vpop.f32.mrf.mxu0
  %1175 = vmatprep.mubr.f32.mxu0 %v1050
  %1176 = vmatmul.mubr.f32.gmra.mxu0 %v1011
  %v1177 = vpop.f32.mrf.mxu0
  %v1178 = vadd.f32 0.0, %v1177
  %v1179 = vpop.f32.mrf.mxu0
  %1180 = vmatprep.mubr.f32.mxu0 %v1053
  %1181 = vmatmul.mubr.f32.gmra.mxu0 %v1013
  %v1182 = vpop.f32.mrf.mxu0
  %v1183 = vadd.f32 0.0, %v1182
  %v1184 = vpop.f32.mrf.mxu0
  %1185 = vmatprep.mubr.f32.mxu0 %v1056
  %1186 = vmatmul.mubr.f32.gmra.mxu0 %v1015
  %v1187 = vpop.f32.mrf.mxu0
  %v1188 = vadd.f32 0.0, %v1187
  %v1189 = vpop.f32.mrf.mxu0
  %1190 = vmatprep.mubr.f32.mxu0 %v1059
  %1191 = vmatmul.mubr.f32.gmra.mxu0 %v1017
  %v1192 = vpop.f32.mrf.mxu0
  %v1193 = vadd.f32 0.0, %v1192
  %v1194 = vpop.f32.mrf.mxu0
  %1195 = vmatprep.mubr.f32.mxu0 %v1062
  %1196 = vmatmul.mubr.f32.gmra.mxu0 %v1019
  %v1197 = vpop.f32.mrf.mxu0
  %v1198 = vadd.f32 0.0, %v1197
  %v1199 = vpop.f32.mrf.mxu0
  %1200 = vdwg.mxu0
  %vm1201 = vcmask 64512
  %v1202 = vsel %vm1201, %v1133, 0.0
  %v1203 = vsel %vm1201, %v1138, 0.0
  %v1204 = vadd.f32 %v1202, %v1203
  %v1205 = vsel %vm1201, %v1143, 0.0
  %v1206 = vadd.f32 %v1204, %v1205
  %v1207 = vsel %vm1201, %v1148, 0.0
  %v1208 = vadd.f32 %v1206, %v1207
  %v1209 = vsel %vm1201, %v1153, 0.0
  %v1210 = vadd.f32 %v1208, %v1209
  %v1211 = vsel %vm1201, %v1158, 0.0
  %v1212 = vadd.f32 %v1210, %v1211
  %v1213 = vsel %vm1201, %v1163, 0.0
  %v1214 = vadd.f32 %v1212, %v1213
  %v1215 = vsel %vm1201, %v1168, 0.0
  %v1216 = vadd.f32 %v1214, %v1215
  %v1217 = vsel %vm1201, %v1173, 0.0
  %v1218 = vadd.f32 %v1216, %v1217
  %v1219 = vsel %vm1201, %v1178, 0.0
  %v1220 = vadd.f32 %v1218, %v1219
  %v1221 = vsel %vm1201, %v1183, 0.0
  %v1222 = vadd.f32 %v1220, %v1221
  %v1223 = vsel %vm1201, %v1188, 0.0
  %v1224 = vadd.f32 %v1222, %v1223
  %v1225 = vsel %vm1201, %v1193, 0.0
  %v1226 = vadd.f32 %v1224, %v1225
  %vm1227 = vcmask 62464
  %v1228 = vsel %vm1227, %v1198, 0.0
  %v1229 = vadd.f32 %v1226, %v1228
  %v1230 = vrot.slane %v1229, 4
  %v1231 = vadd.f32 %v1229, %v1230
  %v1232 = vrot.slane %v1231, 2
  %v1233 = vadd.f32 %v1231, %v1232
  %v1234 = vrot.slane %v1233, 1
  %v1235 = vadd.f32 %v1233, %v1234
  %v1236 = vmul.f32 %v1235, 0.009090909
  %v1237 = vsub.f32 %v1133, %v1236
  %v1238 = vsub.f32 %v1138, %v1236
  %v1239 = vsub.f32 %v1143, %v1236
  %v1240 = vsub.f32 %v1148, %v1236
  %v1241 = vsub.f32 %v1153, %v1236
  %v1242 = vsub.f32 %v1158, %v1236
  %v1243 = vsub.f32 %v1163, %v1236
  %v1244 = vsub.f32 %v1168, %v1236
  %v1245 = vsub.f32 %v1173, %v1236
  %v1246 = vsub.f32 %v1178, %v1236
  %v1247 = vsub.f32 %v1183, %v1236
  %v1248 = vsub.f32 %v1188, %v1236
  %v1249 = vsub.f32 %v1193, %v1236
  %v1250 = vsub.f32 %v1198, %v1236
  %v1251 = vmul.f32 %v1237, %v1237
  %v1252 = vmul.f32 %v1238, %v1238
  %v1253 = vmul.f32 %v1239, %v1239
  %v1254 = vmul.f32 %v1240, %v1240
  %v1255 = vmul.f32 %v1241, %v1241
  %v1256 = vmul.f32 %v1242, %v1242
  %v1257 = vmul.f32 %v1243, %v1243
  %v1258 = vmul.f32 %v1244, %v1244
  %v1259 = vmul.f32 %v1245, %v1245
  %v1260 = vmul.f32 %v1246, %v1246
  %v1261 = vmul.f32 %v1247, %v1247
  %v1262 = vmul.f32 %v1248, %v1248
  %v1263 = vmul.f32 %v1249, %v1249
  %v1264 = vmul.f32 %v1250, %v1250
  %v1265 = vsel %vm1201, %v1251, 0.0
  %v1266 = vsel %vm1201, %v1252, 0.0
  %v1267 = vadd.f32 %v1265, %v1266
  %v1268 = vsel %vm1201, %v1253, 0.0
  %v1269 = vadd.f32 %v1267, %v1268
  %v1270 = vsel %vm1201, %v1254, 0.0
  %v1271 = vadd.f32 %v1269, %v1270
  %v1272 = vsel %vm1201, %v1255, 0.0
  %v1273 = vadd.f32 %v1271, %v1272
  %v1274 = vsel %vm1201, %v1256, 0.0
  %v1275 = vadd.f32 %v1273, %v1274
  %v1276 = vsel %vm1201, %v1257, 0.0
  %v1277 = vadd.f32 %v1275, %v1276
  %v1278 = vsel %vm1201, %v1258, 0.0
  %v1279 = vadd.f32 %v1277, %v1278
  %v1280 = vsel %vm1201, %v1259, 0.0
  %v1281 = vadd.f32 %v1279, %v1280
  %v1282 = vsel %vm1201, %v1260, 0.0
  %v1283 = vadd.f32 %v1281, %v1282
  %v1284 = vsel %vm1201, %v1261, 0.0
  %v1285 = vadd.f32 %v1283, %v1284
  %v1286 = vsel %vm1201, %v1262, 0.0
  %v1287 = vadd.f32 %v1285, %v1286
  %v1288 = vsel %vm1201, %v1263, 0.0
  %v1289 = vadd.f32 %v1287, %v1288
  %v1290 = vsel %vm1227, %v1264, 0.0
  %v1291 = vadd.f32 %v1289, %v1290
  %v1292 = vrot.slane %v1291, 4
  %v1293 = vadd.f32 %v1291, %v1292
  %v1294 = vrot.slane %v1293, 2
  %v1295 = vadd.f32 %v1293, %v1294
  %v1296 = vrot.slane %v1295, 1
  %v1297 = vadd.f32 %v1295, %v1296
  %v1298 = vmul.f32 %v1297, 0.009090909
  %v1299 = vld [vmem:[%s1 + $0x36] sm:$0x1]
  %v1300 = vadd.f32 %v1298, 1e-05
  %v1301 = vrsqrt.pop %v1300
  %v1302 = vmul.f32 %v1299, %v1301
  %v1303 = vlaneseq
  %v1304 = vshrl.u32 %v1303, 7
  %v1305 = vsub.s32 0, %v1304
  %v1306 = vrot.slane %v1302, %v1305
  %v1307 = vmul.f32 %v1237, %v1306
  %v1308 = vmul.f32 %v1238, %v1306
  %v1309 = vmul.f32 %v1239, %v1306
  %v1310 = vmul.f32 %v1240, %v1306
  %v1311 = vmul.f32 %v1241, %v1306
  %v1312 = vmul.f32 %v1242, %v1306
  %v1313 = vmul.f32 %v1243, %v1306
  %v1314 = vmul.f32 %v1244, %v1306
  %v1315 = vmul.f32 %v1245, %v1306
  %v1316 = vmul.f32 %v1246, %v1306
  %v1317 = vmul.f32 %v1247, %v1306
  %v1318 = vmul.f32 %v1248, %v1306
  %v1319 = vmul.f32 %v1249, %v1306
  %v1320 = vmul.f32 %v1250, %v1306
  %v1321 = vld [vmem:[%s1 + $0x37] sm:$0x1]
  %v1322 = vlaneseq
  %v1323 = vshrl.u32 %v1322, 7
  %v1324 = vsub.s32 0, %v1323
  %v1325 = vrot.slane %v1321, %v1324
  %v1326 = vadd.f32 %v1307, %v1325
  %v1327 = vadd.f32 %v1308, %v1325
  %v1328 = vadd.f32 %v1309, %v1325
  %v1329 = vadd.f32 %v1310, %v1325
  %v1330 = vadd.f32 %v1311, %v1325
  %v1331 = vadd.f32 %v1312, %v1325
  %v1332 = vadd.f32 %v1313, %v1325
  %v1333 = vadd.f32 %v1314, %v1325
  %v1334 = vadd.f32 %v1315, %v1325
  %v1335 = vadd.f32 %v1316, %v1325
  %v1336 = vadd.f32 %v1317, %v1325
  %v1337 = vadd.f32 %v1318, %v1325
  %v1338 = vadd.f32 %v1319, %v1325
  %v1339 = vadd.f32 %v1320, %v1325
  %v1340 = vmax.f32 %v1326, 0.0
  %v1341 = vmax.f32 %v1327, 0.0
  %v1342 = vmax.f32 %v1328, 0.0
  %v1343 = vmax.f32 %v1329, 0.0
  %v1344 = vmax.f32 %v1330, 0.0
  %v1345 = vmax.f32 %v1331, 0.0
  %v1346 = vmax.f32 %v1332, 0.0
  %v1347 = vmax.f32 %v1333, 0.0
  %v1348 = vmax.f32 %v1334, 0.0
  %v1349 = vmax.f32 %v1335, 0.0
  %v1350 = vmax.f32 %v1336, 0.0
  %v1351 = vmax.f32 %v1337, 0.0
  %v1352 = vmax.f32 %v1338, 0.0
  %v1353 = vmax.f32 %v1339, 0.0
  %v1354 = vld [vmem:[%s1 + $0x10] sm:$0xff]
  %1356 = vrot.lane.b32.xlu0 %v1354, 64
  %v1357 = vpop.permute.xlu0 %1356
  %v1360 = vsel %vm1201, %v1340, 0
  %v1363 = vsel %vm1201, %v1341, 0
  %v1366 = vsel %vm1201, %v1342, 0
  %v1369 = vsel %vm1201, %v1343, 0
  %v1372 = vsel %vm1201, %v1344, 0
  %v1375 = vsel %vm1201, %v1345, 0
  %v1378 = vsel %vm1201, %v1346, 0
  %v1381 = vsel %vm1201, %v1347, 0
  %v1384 = vsel %vm1201, %v1348, 0
  %v1387 = vsel %vm1201, %v1349, 0
  %v1390 = vsel %vm1201, %v1350, 0
  %v1393 = vsel %vm1201, %v1351, 0
  %v1396 = vsel %vm1201, %v1352, 0
  %v1399 = vsel %vm1201, %v1353, 0
  %1401 = vmatprep.subr.mxu0 0.0
  %1402 = vmatpush1.msra.mxu0 0.0
  %1403 = vmatprep.subr.mxu0 0.0
  %1404 = vmatpush1.msra.mxu0 0.0
  %1405 = vmatprep.subr.mxu0 0.0
  %1406 = vmatpush1.msra.mxu0 0.0
  %1407 = vmatprep.subr.mxu0 0.0
  %1408 = vmatpush1.msra.mxu0 0.0
  %1409 = vmatprep.subr.mxu0 0.0
  %1410 = vmatpush1.msra.mxu0 0.0
  %1411 = vmatprep.subr.mxu0 0.0
  %1412 = vmatpush1.msra.mxu0 0.0
  %1413 = vmatprep.subr.mxu0 0.0
  %1414 = vmatpush1.msra.mxu0 0.0
  %1415 = vmatprep.subr.mxu0 0.0
  %1416 = vmatpush1.msra.mxu0 0.0
  %1417 = vmatprep.subr.mxu0 0.0
  %1418 = vmatpush1.msra.mxu0 0.0
  %1419 = vmatprep.subr.mxu0 0.0
  %1420 = vmatpush1.msra.mxu0 0.0
  %1421 = vmatprep.subr.mxu0 0.0
  %1422 = vmatpush1.msra.mxu0 0.0
  %1423 = vmatprep.subr.mxu0 0.0
  %1424 = vmatpush1.msra.mxu0 0.0
  %1425 = vmatprep.subr.mxu0 0.0
  %1426 = vmatpush1.msra.mxu0 0.0
  %1427 = vmatprep.subr.mxu0 0.0
  %1428 = vmatpush1.msra.mxu0 0.0
  %1429 = vmatprep.subr.mxu0 0.0
  %1430 = vmatpush1.msra.mxu0 0.0
  %1431 = vmatprep.subr.mxu0 0.0
  %1432 = vmatpush1.msra.mxu0 %v1357
  %1433 = vmatprep.subr.mxu0 0.0
  %1434 = vmatpush2.msra.mxu0 0.0
  %1435 = vmatprep.subr.mxu0 0.0
  %1436 = vmatpush2.msra.mxu0 0.0
  %1437 = vmatprep.subr.mxu0 0.0
  %1438 = vmatpush2.msra.mxu0 0.0
  %1439 = vmatprep.subr.mxu0 0.0
  %1440 = vmatpush2.msra.mxu0 0.0
  %1441 = vmatprep.subr.mxu0 0.0
  %1442 = vmatpush2.msra.mxu0 0.0
  %1443 = vmatprep.subr.mxu0 0.0
  %1444 = vmatpush2.msra.mxu0 0.0
  %1445 = vmatprep.subr.mxu0 0.0
  %1446 = vmatpush2.msra.mxu0 0.0
  %1447 = vmatprep.subr.mxu0 0.0
  %1448 = vmatpush2.msra.mxu0 0.0
  %1449 = vmatprep.subr.mxu0 0.0
  %1450 = vmatpush2.msra.mxu0 0.0
  %1451 = vmatprep.subr.mxu0 0.0
  %1452 = vmatpush2.msra.mxu0 0.0
  %1453 = vmatprep.subr.mxu0 0.0
  %1454 = vmatpush2.msra.mxu0 0.0
  %1455 = vmatprep.subr.mxu0 0.0
  %1456 = vmatpush2.msra.mxu0 0.0
  %1457 = vmatprep.subr.mxu0 0.0
  %1458 = vmatpush2.msra.mxu0 0.0
  %1459 = vmatprep.subr.mxu0 0.0
  %1460 = vmatpush2.msra.mxu0 0.0
  %1461 = vmatprep.subr.mxu0 0.0
  %1462 = vmatpush2.msra.mxu0 0.0
  %1463 = vmatprep.subr.mxu0 0.0
  %1464 = vmatpush2.msra.mxu0 0.0
  %1465 = vmatprep.mubr.f32.mxu0 0.0
  %1466 = vmatmul.mubr.f32.gmra.mxu0 %v1360
  %v1467 = vpop.f32.mrf.mxu0
  %v1468 = vadd.f32 0.0, %v1467
  %v1469 = vpop.f32.mrf.mxu0
  %1470 = vmatprep.mubr.f32.mxu0 0.0
  %1471 = vmatmul.mubr.f32.gmra.mxu0 %v1363
  %v1472 = vpop.f32.mrf.mxu0
  %v1473 = vadd.f32 0.0, %v1472
  %v1474 = vpop.f32.mrf.mxu0
  %1475 = vmatprep.mubr.f32.mxu0 0.0
  %1476 = vmatmul.mubr.f32.gmra.mxu0 %v1366
  %v1477 = vpop.f32.mrf.mxu0
  %v1478 = vadd.f32 0.0, %v1477
  %v1479 = vpop.f32.mrf.mxu0
  %1480 = vmatprep.mubr.f32.mxu0 0.0
  %1481 = vmatmul.mubr.f32.gmra.mxu0 %v1369
  %v1482 = vpop.f32.mrf.mxu0
  %v1483 = vadd.f32 0.0, %v1482
  %v1484 = vpop.f32.mrf.mxu0
  %1485 = vmatprep.mubr.f32.mxu0 0.0
  %1486 = vmatmul.mubr.f32.gmra.mxu0 %v1372
  %v1487 = vpop.f32.mrf.mxu0
  %v1488 = vadd.f32 0.0, %v1487
  %v1489 = vpop.f32.mrf.mxu0
  %1490 = vmatprep.mubr.f32.mxu0 0.0
  %1491 = vmatmul.mubr.f32.gmra.mxu0 %v1375
  %v1492 = vpop.f32.mrf.mxu0
  %v1493 = vadd.f32 0.0, %v1492
  %v1494 = vpop.f32.mrf.mxu0
  %1495 = vmatprep.mubr.f32.mxu0 0.0
  %1496 = vmatmul.mubr.f32.gmra.mxu0 %v1378
  %v1497 = vpop.f32.mrf.mxu0
  %v1498 = vadd.f32 0.0, %v1497
  %v1499 = vpop.f32.mrf.mxu0
  %1500 = vmatprep.mubr.f32.mxu0 0.0
  %1501 = vmatmul.mubr.f32.gmra.mxu0 %v1381
  %v1502 = vpop.f32.mrf.mxu0
  %v1503 = vadd.f32 0.0, %v1502
  %v1504 = vpop.f32.mrf.mxu0
  %1505 = vmatprep.mubr.f32.mxu0 0.0
  %1506 = vmatmul.mubr.f32.gmra.mxu0 %v1384
  %v1507 = vpop.f32.mrf.mxu0
  %v1508 = vadd.f32 0.0, %v1507
  %v1509 = vpop.f32.mrf.mxu0
  %1510 = vmatprep.mubr.f32.mxu0 0.0
  %1511 = vmatmul.mubr.f32.gmra.mxu0 %v1387
  %v1512 = vpop.f32.mrf.mxu0
  %v1513 = vadd.f32 0.0, %v1512
  %v1514 = vpop.f32.mrf.mxu0
  %1515 = vmatprep.mubr.f32.mxu0 0.0
  %1516 = vmatmul.mubr.f32.gmra.mxu0 %v1390
  %v1517 = vpop.f32.mrf.mxu0
  %v1518 = vadd.f32 0.0, %v1517
  %v1519 = vpop.f32.mrf.mxu0
  %1520 = vmatprep.mubr.f32.mxu0 0.0
  %1521 = vmatmul.mubr.f32.gmra.mxu0 %v1393
  %v1522 = vpop.f32.mrf.mxu0
  %v1523 = vadd.f32 0.0, %v1522
  %v1524 = vpop.f32.mrf.mxu0
  %1525 = vmatprep.mubr.f32.mxu0 0.0
  %1526 = vmatmul.mubr.f32.gmra.mxu0 %v1396
  %v1527 = vpop.f32.mrf.mxu0
  %v1528 = vadd.f32 0.0, %v1527
  %v1529 = vpop.f32.mrf.mxu0
  %1530 = vmatprep.mubr.f32.mxu0 0.0
  %1531 = vmatmul.mubr.f32.gmra.mxu0 %v1399
  %v1532 = vpop.f32.mrf.mxu0
  %v1533 = vadd.f32 0.0, %v1532
  %v1534 = vpop.f32.mrf.mxu0
  %1535 = vdwg.mxu0
  %v1536 = vsel %vm126, %v1533, 0.0
  %v1551 = vrot.slane %v1468, 6
  %v1552 = vrot.slane %v1473, 6
  %v1553 = vsel %vm122, %v1551, %v1552
  %v1554 = vrot.slane %v1478, 6
  %v1555 = vsel %vm122, %v1552, %v1554
  %v1556 = vrot.slane %v1483, 6
  %v1557 = vsel %vm122, %v1554, %v1556
  %v1558 = vrot.slane %v1488, 6
  %v1559 = vsel %vm122, %v1556, %v1558
  %v1560 = vrot.slane %v1493, 6
  %v1561 = vsel %vm122, %v1558, %v1560
  %v1562 = vrot.slane %v1498, 6
  %v1563 = vsel %vm122, %v1560, %v1562
  %v1564 = vrot.slane %v1503, 6
  %v1565 = vsel %vm122, %v1562, %v1564
  %v1566 = vrot.slane %v1508, 6
  %v1567 = vsel %vm122, %v1564, %v1566
  %v1568 = vrot.slane %v1513, 6
  %v1569 = vsel %vm122, %v1566, %v1568
  %v1570 = vrot.slane %v1518, 6
  %v1571 = vsel %vm122, %v1568, %v1570
  %v1572 = vrot.slane %v1523, 6
  %v1573 = vsel %vm122, %v1570, %v1572
  %v1574 = vrot.slane %v1528, 6
  %v1575 = vsel %vm122, %v1572, %v1574
  %v1576 = vrot.slane %v1533, 6
  %v1577 = vsel %vm122, %v1574, %v1576
  %1578 = vrot.lane.b32.xlu0 %v1551, 125
  %v1579 = vpop.permute.xlu0 %1578
  %1580 = vrot.lane.b32.xlu0 %v1553, 125
  %v1581 = vpop.permute.xlu0 %1580
  %1582 = vrot.lane.b32.xlu0 %v1555, 125
  %v1583 = vpop.permute.xlu0 %1582
  %1584 = vrot.lane.b32.xlu0 %v1557, 125
  %v1585 = vpop.permute.xlu0 %1584
  %1586 = vrot.lane.b32.xlu0 %v1559, 125
  %v1587 = vpop.permute.xlu0 %1586
  %1588 = vrot.lane.b32.xlu0 %v1561, 125
  %v1589 = vpop.permute.xlu0 %1588
  %1590 = vrot.lane.b32.xlu0 %v1563, 125
  %v1591 = vpop.permute.xlu0 %1590
  %1592 = vrot.lane.b32.xlu0 %v1565, 125
  %v1593 = vpop.permute.xlu0 %1592
  %1594 = vrot.lane.b32.xlu0 %v1567, 125
  %v1595 = vpop.permute.xlu0 %1594
  %1596 = vrot.lane.b32.xlu0 %v1569, 125
  %v1597 = vpop.permute.xlu0 %1596
  %1598 = vrot.lane.b32.xlu0 %v1571, 125
  %v1599 = vpop.permute.xlu0 %1598
  %1600 = vrot.lane.b32.xlu0 %v1573, 125
  %v1601 = vpop.permute.xlu0 %1600
  %1602 = vrot.lane.b32.xlu0 %v1575, 125
  %v1603 = vpop.permute.xlu0 %1602
  %1604 = vrot.lane.b32.xlu0 %v1577, 125
  %v1605 = vpop.permute.xlu0 %1604
  %v1620 = vsel %vm122, 0.0, %v1579
  %v1621 = vadd.f32 %v1468, %v1620
  %v1622 = vadd.f32 %v1473, %v1581
  %v1623 = vadd.f32 %v1478, %v1583
  %v1624 = vadd.f32 %v1483, %v1585
  %v1625 = vadd.f32 %v1488, %v1587
  %v1626 = vadd.f32 %v1493, %v1589
  %v1627 = vadd.f32 %v1498, %v1591
  %v1628 = vadd.f32 %v1503, %v1593
  %v1629 = vadd.f32 %v1508, %v1595
  %v1630 = vadd.f32 %v1513, %v1597
  %v1631 = vadd.f32 %v1518, %v1599
  %v1632 = vadd.f32 %v1523, %v1601
  %v1633 = vadd.f32 %v1528, %v1603
  %v1634 = vadd.f32 %v1536, %v1605
  %v1635 = vrot.slane %v1468, 4
  %v1636 = vrot.slane %v1473, 4
  %v1637 = vsel %vm124, %v1635, %v1636
  %v1638 = vrot.slane %v1478, 4
  %v1639 = vsel %vm124, %v1636, %v1638
  %v1640 = vrot.slane %v1483, 4
  %v1641 = vsel %vm124, %v1638, %v1640
  %v1642 = vrot.slane %v1488, 4
  %v1643 = vsel %vm124, %v1640, %v1642
  %v1644 = vrot.slane %v1493, 4
  %v1645 = vsel %vm124, %v1642, %v1644
  %v1646 = vrot.slane %v1498, 4
  %v1647 = vsel %vm124, %v1644, %v1646
  %v1648 = vrot.slane %v1503, 4
  %v1649 = vsel %vm124, %v1646, %v1648
  %v1650 = vrot.slane %v1508, 4
  %v1651 = vsel %vm124, %v1648, %v1650
  %v1652 = vrot.slane %v1513, 4
  %v1653 = vsel %vm124, %v1650, %v1652
  %v1654 = vrot.slane %v1518, 4
  %v1655 = vsel %vm124, %v1652, %v1654
  %v1656 = vrot.slane %v1523, 4
  %v1657 = vsel %vm124, %v1654, %v1656
  %v1658 = vrot.slane %v1528, 4
  %v1659 = vsel %vm124, %v1656, %v1658
  %v1660 = vrot.slane %v1533, 4
  %v1661 = vsel %vm124, %v1658, %v1660
  %1662 = vrot.lane.b32.xlu0 %v1635, 122
  %v1663 = vpop.permute.xlu0 %1662
  %1664 = vrot.lane.b32.xlu0 %v1637, 122
  %v1665 = vpop.permute.xlu0 %1664
  %1666 = vrot.lane.b32.xlu0 %v1639, 122
  %v1667 = vpop.permute.xlu0 %1666
  %1668 = vrot.lane.b32.xlu0 %v1641, 122
  %v1669 = vpop.permute.xlu0 %1668
  %1670 = vrot.lane.b32.xlu0 %v1643, 122
  %v1671 = vpop.permute.xlu0 %1670
  %1672 = vrot.lane.b32.xlu0 %v1645, 122
  %v1673 = vpop.permute.xlu0 %1672
  %1674 = vrot.lane.b32.xlu0 %v1647, 122
  %v1675 = vpop.permute.xlu0 %1674
  %1676 = vrot.lane.b32.xlu0 %v1649, 122
  %v1677 = vpop.permute.xlu0 %1676
  %1678 = vrot.lane.b32.xlu0 %v1651, 122
  %v1679 = vpop.permute.xlu0 %1678
  %1680 = vrot.lane.b32.xlu0 %v1653, 122
  %v1681 = vpop.permute.xlu0 %1680
  %1682 = vrot.lane.b32.xlu0 %v1655, 122
  %v1683 = vpop.permute.xlu0 %1682
  %1684 = vrot.lane.b32.xlu0 %v1657, 122
  %v1685 = vpop.permute.xlu0 %1684
  %1686 = vrot.lane.b32.xlu0 %v1659, 122
  %v1687 = vpop.permute.xlu0 %1686
  %1688 = vrot.lane.b32.xlu0 %v1661, 122
  %v1689 = vpop.permute.xlu0 %1688
  %1690 = vrot.lane.b32.xlu0 %v1660, 122
  %v1691 = vpop.permute.xlu0 %1690
  %v1707 = vsel %vm124, 0.0, %v1663
  %v1708 = vadd.f32 %v1621, %v1707
  %v1709 = vadd.f32 %v1622, %v1665
  %v1710 = vadd.f32 %v1623, %v1667
  %v1711 = vadd.f32 %v1624, %v1669
  %v1712 = vadd.f32 %v1625, %v1671
  %v1713 = vadd.f32 %v1626, %v1673
  %v1714 = vadd.f32 %v1627, %v1675
  %v1715 = vadd.f32 %v1628, %v1677
  %v1716 = vadd.f32 %v1629, %v1679
  %v1717 = vadd.f32 %v1630, %v1681
  %v1718 = vadd.f32 %v1631, %v1683
  %v1719 = vadd.f32 %v1632, %v1685
  %v1720 = vadd.f32 %v1633, %v1687
  %v1721 = vadd.f32 %v1634, %v1689
  %v1722 = vadd.f32 %v1691, 0.0
  %v1723 = vld [vmem:[%s1 + $0x31] sm:$0x1]
  %v1724 = vlaneseq
  %v1725 = vshrl.u32 %v1724, 7
  %v1726 = vsub.s32 0, %v1725
  %v1727 = vrot.slane %v1723, %v1726
  %v1728 = vadd.f32 %v1708, %v1727
  %v1729 = vadd.f32 %v1709, %v1727
  %v1730 = vadd.f32 %v1710, %v1727
  %v1731 = vadd.f32 %v1711, %v1727
  %v1732 = vadd.f32 %v1712, %v1727
  %v1733 = vadd.f32 %v1713, %v1727
  %v1734 = vadd.f32 %v1714, %v1727
  %v1735 = vadd.f32 %v1715, %v1727
  %v1736 = vadd.f32 %v1716, %v1727
  %v1737 = vadd.f32 %v1717, %v1727
  %v1738 = vadd.f32 %v1718, %v1727
  %v1739 = vadd.f32 %v1719, %v1727
  %v1740 = vadd.f32 %v1720, %v1727
  %v1741 = vadd.f32 %v1721, %v1727
  %v1742 = vadd.f32 %v1722, %v1727
  %v1743 = vsub.f32 0.0, %v1728
  %v1744 = vsub.f32 0.0, %v1729
  %v1745 = vsub.f32 0.0, %v1730
  %v1746 = vsub.f32 0.0, %v1731
  %v1747 = vsub.f32 0.0, %v1732
  %v1748 = vsub.f32 0.0, %v1733
  %v1749 = vsub.f32 0.0, %v1734
  %v1750 = vsub.f32 0.0, %v1735
  %v1751 = vsub.f32 0.0, %v1736
  %v1752 = vsub.f32 0.0, %v1737
  %v1753 = vsub.f32 0.0, %v1738
  %v1754 = vsub.f32 0.0, %v1739
  %v1755 = vsub.f32 0.0, %v1740
  %v1756 = vsub.f32 0.0, %v1741
  %v1757 = vsub.f32 0.0, %v1742
  %v1758 = vmul.f32 %v1743, 1.442695
  %v1759 = vpow.pop %v1758
  %v1760 = vmul.f32 %v1744, 1.442695
  %v1761 = vpow.pop %v1760
  %v1762 = vmul.f32 %v1745, 1.442695
  %v1763 = vpow.pop %v1762
  %v1764 = vmul.f32 %v1746, 1.442695
  %v1765 = vpow.pop %v1764
  %v1766 = vmul.f32 %v1747, 1.442695
  %v1767 = vpow.pop %v1766
  %v1768 = vmul.f32 %v1748, 1.442695
  %v1769 = vpow.pop %v1768
  %v1770 = vmul.f32 %v1749, 1.442695
  %v1771 = vpow.pop %v1770
  %v1772 = vmul.f32 %v1750, 1.442695
  %v1773 = vpow.pop %v1772
  %v1774 = vmul.f32 %v1751, 1.442695
  %v1775 = vpow.pop %v1774
  %v1776 = vmul.f32 %v1752, 1.442695
  %v1777 = vpow.pop %v1776
  %v1778 = vmul.f32 %v1753, 1.442695
  %v1779 = vpow.pop %v1778
  %v1780 = vmul.f32 %v1754, 1.442695
  %v1781 = vpow.pop %v1780
  %v1782 = vmul.f32 %v1755, 1.442695
  %v1783 = vpow.pop %v1782
  %v1784 = vmul.f32 %v1756, 1.442695
  %v1785 = vpow.pop %v1784
  %v1786 = vmul.f32 %v1757, 1.442695
  %v1787 = vpow.pop %v1786
  %v1788 = vadd.f32 %v1759, 1.0
  %v1789 = vadd.f32 %v1761, 1.0
  %v1790 = vadd.f32 %v1763, 1.0
  %v1791 = vadd.f32 %v1765, 1.0
  %v1792 = vadd.f32 %v1767, 1.0
  %v1793 = vadd.f32 %v1769, 1.0
  %v1794 = vadd.f32 %v1771, 1.0
  %v1795 = vadd.f32 %v1773, 1.0
  %v1796 = vadd.f32 %v1775, 1.0
  %v1797 = vadd.f32 %v1777, 1.0
  %v1798 = vadd.f32 %v1779, 1.0
  %v1799 = vadd.f32 %v1781, 1.0
  %v1800 = vadd.f32 %v1783, 1.0
  %v1801 = vadd.f32 %v1785, 1.0
  %v1802 = vadd.f32 %v1787, 1.0
  %v1803 = vrcp.pop %v1788
  %v1804 = vmul.f32 1.0, %v1803
  %v1805 = vrcp.pop %v1789
  %v1806 = vmul.f32 1.0, %v1805
  %v1807 = vrcp.pop %v1790
  %v1808 = vmul.f32 1.0, %v1807
  %v1809 = vrcp.pop %v1791
  %v1810 = vmul.f32 1.0, %v1809
  %v1811 = vrcp.pop %v1792
  %v1812 = vmul.f32 1.0, %v1811
  %v1813 = vrcp.pop %v1793
  %v1814 = vmul.f32 1.0, %v1813
  %v1815 = vrcp.pop %v1794
  %v1816 = vmul.f32 1.0, %v1815
  %v1817 = vrcp.pop %v1795
  %v1818 = vmul.f32 1.0, %v1817
  %v1819 = vrcp.pop %v1796
  %v1820 = vmul.f32 1.0, %v1819
  %v1821 = vrcp.pop %v1797
  %v1822 = vmul.f32 1.0, %v1821
  %v1823 = vrcp.pop %v1798
  %v1824 = vmul.f32 1.0, %v1823
  %v1825 = vrcp.pop %v1799
  %v1826 = vmul.f32 1.0, %v1825
  %v1827 = vrcp.pop %v1800
  %v1828 = vmul.f32 1.0, %v1827
  %v1829 = vrcp.pop %v1801
  %v1830 = vmul.f32 1.0, %v1829
  %v1831 = vrcp.pop %v1802
  %v1832 = vmul.f32 1.0, %v1831
  %vm1833 = vcmask 23552
  %1834 = vst.msk [vmem:[%s3] sm:$0xff] %vm1833, %v1804
  %1835 = vst.msk [vmem:[%s3 + $0x8] sm:$0xff] %vm1833, %v1806
  %1836 = vst.msk [vmem:[%s3 + $0x10] sm:$0xff] %vm1833, %v1808
  %1837 = vst.msk [vmem:[%s3 + $0x18] sm:$0xff] %vm1833, %v1810
  %1838 = vst.msk [vmem:[%s3 + $0x20] sm:$0xff] %vm1833, %v1812
  %1839 = vst.msk [vmem:[%s3 + $0x28] sm:$0xff] %vm1833, %v1814
  %1840 = vst.msk [vmem:[%s3 + $0x30] sm:$0xff] %vm1833, %v1816
  %1841 = vst.msk [vmem:[%s3 + $0x38] sm:$0xff] %vm1833, %v1818
  %1842 = vst.msk [vmem:[%s3 + $0x40] sm:$0xff] %vm1833, %v1820
  %1843 = vst.msk [vmem:[%s3 + $0x48] sm:$0xff] %vm1833, %v1822
  %1844 = vst.msk [vmem:[%s3 + $0x50] sm:$0xff] %vm1833, %v1824
  %1845 = vst.msk [vmem:[%s3 + $0x58] sm:$0xff] %vm1833, %v1826
  %1846 = vst.msk [vmem:[%s3 + $0x60] sm:$0xff] %vm1833, %v1828
  %1847 = vst.msk [vmem:[%s3 + $0x68] sm:$0xff] %vm1833, %v1830
  %vm1848 = vcmask 17408
  %1849 = vst.msk [vmem:[%s3 + $0x70] sm:$0x3] %vm1848, %v1832
  // Predicated region
  $region14: #{_pallas_forward.1} parent=0 // pred_check
    _
  $region15: #{_pallas_forward.1} parent=0 // pred_check_branch
    %1851 = sbr.rel (0) target = $region17
  $region16: #{_pallas_forward.1} parent=0 // pred_region
    _
  $region17: #{_pallas_forward.1} parent=0 // pred_fallthru
    _
  // Predicated region
  $region18: #{_pallas_forward.1} parent=0 // pred_check
    _
  $region19: #{_pallas_forward.1} parent=0 // pred_check_branch
    %1853 = sbr.rel (0) target = $region21
  $region20: #{_pallas_forward.1} parent=0 // pred_region
    _
  $region21: #{_pallas_forward.1} parent=0 // pred_fallthru
    _

</llo_original>
